<compile_context>
chip_gen: v5e
topology: v5e:2x2
jax: 0.10.0
libtpu: 0.0.40
codegen_flags: <defaults>
</compile_context>

<pallas_src>
import numpy as np
import jax
import jax.numpy as jnp
from jax.experimental import pallas as pl
from jax.experimental.pallas import tpu as pltpu

COMPUTE_DTYPE = jnp.bfloat16


# ----------------------------------------------------------------------------
# In-kernel building blocks (pure 2-D dots / adds / relu -> lowering safe)
# ----------------------------------------------------------------------------
def _conv_block(a, rs_ref, cw_ref, brow_ref):
    """Conv2d(3x3, stride 2, pad 1) + ReLU on an activation laid out (H, W*C).

    a:        (H_in, W_in*C_in)  bf16
    rs_ref:   (3, H_out, H_in)   bf16   0/1 row selection (stride-2 + pad)
    cw_ref:   (3, W_in*C_in, W_out*C_out) bf16  expanded conv weight
    brow_ref: (1, W_out*C_out)   f32    bias row
    returns   (H_out, W_out*C_out) bf16
    """
    h_out = rs_ref.shape[1]
    n_out = cw_ref.shape[2]
    acc = jnp.zeros((h_out, n_out), jnp.float32)
    for ky in range(3):
        rows = jnp.dot(rs_ref[ky], a, preferred_element_type=jnp.float32)
        acc = acc + jnp.dot(rows.astype(a.dtype), cw_ref[ky],
                            preferred_element_type=jnp.float32)
    acc = acc + brow_ref[...]
    return jnp.maximum(acc, 0.0).astype(a.dtype)


def _make_encoder_kernel(num_conv, latent_dim):
    def kernel(*refs):
        x_ref = refs[0]
        conv_refs = refs[1:1 + 3 * num_conv]
        wf_ref, bf_ref, wh_ref, bh_ref = refs[1 + 3 * num_conv:1 + 3 * num_conv + 4]
        mu_ref, lv_ref = refs[-2], refs[-1]

        a = x_ref[0]                                     # (H, W*C) bf16
        for layer in range(num_conv):                    # conv stack
            rs_ref, cw_ref, brow_ref = conv_refs[3 * layer:3 * layer + 3]
            a = _conv_block(a, rs_ref, cw_ref, brow_ref)

        # Dropout: identity (eval mode).

        # fc (+ReLU): contraction over (h, w, c); weight rows were permuted at
        # init so this reproduces torch.flatten(NCHW) @ W_fc.T exactly.
        acc = jnp.zeros((1, wf_ref.shape[2]), jnp.float32)
        for h in range(wf_ref.shape[0]):
            acc = acc + jnp.dot(a[h:h + 1, :], wf_ref[h],
                                preferred_element_type=jnp.float32)
        f = jnp.maximum(acc + bf_ref[...], 0.0).astype(a.dtype)

        # Fused mu / log_var heads, f32 result.
        heads = (jnp.dot(f, wh_ref[...], preferred_element_type=jnp.float32)
                 + bh_ref[...])
        mu_ref[0] = heads[:, :latent_dim]
        lv_ref[0] = heads[:, latent_dim:]
    return kernel


# ----------------------------------------------------------------------------
# Init-time weight layout (all layout work hoisted out of the forward pass)
# ----------------------------------------------------------------------------
def _uniform(key, shape, bound):
    return jax.random.uniform(key, shape, jnp.float32, -bound, bound)


def _expand_conv_weights(w_oihw, b, h_in, w_in):
    """Bake stride-2 sampling + zero padding of a 3x3/s2/p1 conv into
    (RS, CW, bias_row) so the conv becomes sum_ky RS[ky] @ A @ CW[ky] + bias
    on activations laid out as (H, W*C)."""
    w_np = np.asarray(w_oihw, np.float32)                # (Cout, Cin, 3, 3)
    b_np = np.asarray(b, np.float32)
    cout, cin = w_np.shape[0], w_np.shape[1]
    h_out = (h_in - 1) // 2 + 1
    w_out = (w_in - 1) // 2 + 1

    rs = np.zeros((3, h_out, h_in), np.float32)
    for ky in range(3):
        for i in range(h_out):
            r = 2 * i + ky - 1                           # padded row -> source row
            if 0 <= r < h_in:
                rs[ky, i, r] = 1.0

    cw = np.zeros((3, w_in * cin, w_out * cout), np.float32)
    for ky in range(3):
        for j in range(w_out):
            for kx in range(3):
                c = 2 * j + kx - 1                       # padded col -> source col
                if 0 <= c < w_in:
                    cw[ky, c * cin:(c + 1) * cin, j * cout:(j + 1) * cout] = \
                        w_np[:, :, ky, kx].T
    bias_row = np.tile(b_np, w_out).reshape(1, w_out * cout)
    return (jnp.asarray(rs, COMPUTE_DTYPE),
            jnp.asarray(cw, COMPUTE_DTYPE),
            jnp.asarray(bias_row, jnp.float32))


def init_encoder_params(key, image_size, input_dim, conv_dims, fc_dim, latent_dim):
    """Returns (kernel-layout params, torch-layout reference params)."""
    params = {"convs": []}
    ref = {"convs": []}

    h = image_size
    prev_c = input_dim
    for cd in conv_dims:
        key, kw, kb = jax.random.split(key, 3)
        bound = 1.0 / np.sqrt(prev_c * 9)
        w = _uniform(kw, (cd, prev_c, 3, 3), bound)      # torch OIHW
        b = _uniform(kb, (cd,), bound)
        ref["convs"].append((w, b))
        params["convs"].append(_expand_conv_weights(w, b, h, h))
        h = (h - 1) // 2 + 1
        prev_c = cd

    s = h                                                # final spatial size
    c_last = conv_dims[-1]
    flat_dim = s * s * c_last

    key, kw, kb = jax.random.split(key, 3)
    bound = 1.0 / np.sqrt(flat_dim)
    w_fc = _uniform(kw, (fc_dim, flat_dim), bound)       # torch (out, in)
    b_fc = _uniform(kb, (fc_dim,), bound)
    ref["fc"] = (w_fc, b_fc)
    # torch flattens NCHW: flat = c*s*s + h*s + w.  Re-lay the weight so the
    # kernel can contract the (h, w*C) activation row by row:
    #   WF[h, w*C + c, f] = w_fc[f, c*s*s + h*s + w]
    wf = (np.asarray(w_fc, np.float32)
            .reshape(fc_dim, c_last, s, s)               # (f, c, h, w)
            .transpose(2, 3, 1, 0)                       # (h, w, c, f)
            .reshape(s, s * c_last, fc_dim))
    params["fc"] = (jnp.asarray(wf, COMPUTE_DTYPE),
                    jnp.asarray(np.asarray(b_fc).reshape(1, fc_dim), jnp.float32))

    key, kmw, kmb, klw, klb = jax.random.split(key, 5)
    bound = 1.0 / np.sqrt(fc_dim)
    w_mu = _uniform(kmw, (latent_dim, fc_dim), bound)    # torch (out, in)
    b_mu = _uniform(kmb, (latent_dim,), bound)
    w_lv = _uniform(klw, (latent_dim, fc_dim), bound)
    b_lv = _uniform(klb, (latent_dim,), bound)
    ref["mu"] = (w_mu, b_mu)
    ref["lv"] = (w_lv, b_lv)
    wh = np.concatenate([np.asarray(w_mu).T, np.asarray(w_lv).T], axis=1)
    bh = np.concatenate([np.asarray(b_mu), np.asarray(b_lv)]).reshape(1, 2 * latent_dim)
    params["heads"] = (jnp.asarray(wh, COMPUTE_DTYPE), jnp.asarray(bh, jnp.float32))
    return params, ref


# ----------------------------------------------------------------------------
# Forward (one pallas_call) + pure-JAX reference
# ----------------------------------------------------------------------------
def encoder_forward(params, x_nchw):
    B, C, H, W = x_nchw.shape
    num_conv = len(params["convs"])
    wf, bf = params["fc"]
    wh, bh = params["heads"]
    latent_dim = wh.shape[1] // 2

    # Only per-forward layout work: NCHW -> (B, H, W*C) bf16 on the input.
    x = jnp.transpose(x_nchw, (0, 2, 3, 1)).reshape(B, H, W * C).astype(COMPUTE_DTYPE)

    weights = []
    for rs, cw, brow in params["convs"]:
        weights += [rs, cw, brow]
    weights += [wf, bf, wh, bh]

    def full_spec(a):
        return pl.BlockSpec(a.shape, lambda b, nd=a.ndim: (0,) * nd)

    in_specs = [pl.BlockSpec((1, H, W * C), lambda b: (b, 0, 0))]
    in_specs += [full_spec(a) for a in weights]
    out_specs = [pl.BlockSpec((1, 1, latent_dim), lambda b: (b, 0, 0)),
                 pl.BlockSpec((1, 1, latent_dim), lambda b: (b, 0, 0))]

    # Advisory cost estimate (per-example flops x batch; weights read once).
    flops = 0
    for rs, cw, _ in params["convs"]:
        h_out, h_in = rs.shape[1], rs.shape[2]
        n_in, n_out = cw.shape[1], cw.shape[2]
        flops += 2 * 3 * (h_out * h_in * n_in + h_out * n_in * n_out)
    flops += 2 * wf.shape[0] * wf.shape[1] * wf.shape[2]
    flops += 2 * wh.shape[0] * wh.shape[1]
    flops *= B
    w_bytes = sum(int(np.prod(a.shape)) * a.dtype.itemsize for a in weights)
    bytes_accessed = int(np.prod(x.shape)) * 2 + w_bytes + 2 * B * latent_dim * 4

    kernel = _make_encoder_kernel(num_conv, latent_dim)
    mu, log_var = pl.pallas_call(
        kernel,
        out_shape=(jax.ShapeDtypeStruct((B, 1, latent_dim), jnp.float32),
                   jax.ShapeDtypeStruct((B, 1, latent_dim), jnp.float32)),
        grid_spec=pltpu.PrefetchScalarGridSpec(
            num_scalar_prefetch=0,
            grid=(B,),
            in_specs=in_specs,
            out_specs=out_specs,
        ),
        compiler_params=pltpu.CompilerParams(dimension_semantics=("parallel",)),
        cost_estimate=pl.CostEstimate(flops=flops, transcendentals=0,
                                      bytes_accessed=bytes_accessed),
    )(x, *weights)

    return mu[:, 0, :], log_var[:, 0, :]


def encoder_reference(ref_params, x_nchw):
    """Pure-JAX f32 reference mirroring the PyTorch module (eval mode)."""
    a = x_nchw
    for w, b in ref_params["convs"]:
        a = jax.lax.conv_general_dilated(
            a, w, window_strides=(2, 2), padding=((1, 1), (1, 1)),
            dimension_numbers=("NCHW", "OIHW", "NCHW"))
        a = jax.nn.relu(a + b.reshape(1, -1, 1, 1))
    a = a.reshape(a.shape[0], -1)                        # torch.flatten(NCHW)
    w, b = ref_params["fc"]
    a = jax.nn.relu(a @ w.T + b)
    w_mu, b_mu = ref_params["mu"]
    w_lv, b_lv = ref_params["lv"]
    return a @ w_mu.T + b_mu, a @ w_lv.T + b_lv


if __name__ == "__main__":
    # Small config: image_size=16, input_dim=4, conv_dims=[8, 16],
    # fc_dim=32, latent_dim=8, batch=2
    image_size, input_dim = 16, 4
    conv_dims, fc_dim, latent_dim = [8, 16], 32, 8
    batch = 2

    key = jax.random.PRNGKey(0)
    key, pkey, xkey = jax.random.split(key, 3)
    params, ref_params = init_encoder_params(
        pkey, image_size, input_dim, conv_dims, fc_dim, latent_dim)
    x = jax.random.normal(xkey, (batch, input_dim, image_size, image_size),
                          jnp.float32)

    mu, log_var = jax.jit(encoder_forward)(params, x)
    jax.block_until_ready((mu, log_var))

    assert mu.shape == (batch, latent_dim), mu.shape
    assert log_var.shape == (batch, latent_dim), log_var.shape

    # Tolerance check against the f32 reference (kernel computes in bf16).
    mu_ref, lv_ref = jax.jit(encoder_reference)(ref_params, x)
    np.testing.assert_allclose(np.asarray(mu), np.asarray(mu_ref),
                               atol=2e-2, rtol=2e-2)
    np.testing.assert_allclose(np.asarray(log_var), np.asarray(lv_ref),
                               atol=2e-2, rtol=2e-2)

    print("KERNEL_OK")
</pallas_src>

<mosaic_0001>
module attributes {stable_mosaic.version = 11 : i64} {
  func.func @kernel(%arg0: i32, %arg1: memref<1x16x64xbf16, #tpu.memory_space<vmem>>, %arg2: memref<3x8x16xbf16, #tpu.memory_space<vmem>>, %arg3: memref<3x64x64xbf16, #tpu.memory_space<vmem>>, %arg4: memref<1x64xf32, #tpu.memory_space<vmem>>, %arg5: memref<3x4x8xbf16, #tpu.memory_space<vmem>>, %arg6: memref<3x64x64xbf16, #tpu.memory_space<vmem>>, %arg7: memref<1x64xf32, #tpu.memory_space<vmem>>, %arg8: memref<4x64x32xbf16, #tpu.memory_space<vmem>>, %arg9: memref<1x32xf32, #tpu.memory_space<vmem>>, %arg10: memref<32x16xbf16, #tpu.memory_space<vmem>>, %arg11: memref<1x16xf32, #tpu.memory_space<vmem>>, %arg12: memref<1x1x8xf32, #tpu.memory_space<vmem>>, %arg13: memref<1x1x8xf32, #tpu.memory_space<vmem>>) attributes {dimension_semantics = [#tpu.dimension_semantics<parallel>], iteration_bounds = array<i64: 2>, scalar_prefetch = 0 : i64, scratch_operands = 0 : i64, tpu.core_type = #tpu.core_type<tc>, window_params = [{transform_indices = @transform_0, window_bounds = array<i64: 1, 16, 64>}, {pipeline_mode = #tpu.pipeline_mode<synchronous>, transform_indices = @transform_1, window_bounds = array<i64: 3, 8, 16>}, {pipeline_mode = #tpu.pipeline_mode<synchronous>, transform_indices = @transform_2, window_bounds = array<i64: 3, 64, 64>}, {pipeline_mode = #tpu.pipeline_mode<synchronous>, transform_indices = @transform_3, window_bounds = array<i64: 1, 64>}, {pipeline_mode = #tpu.pipeline_mode<synchronous>, transform_indices = @transform_4, window_bounds = array<i64: 3, 4, 8>}, {pipeline_mode = #tpu.pipeline_mode<synchronous>, transform_indices = @transform_5, window_bounds = array<i64: 3, 64, 64>}, {pipeline_mode = #tpu.pipeline_mode<synchronous>, transform_indices = @transform_6, window_bounds = array<i64: 1, 64>}, {pipeline_mode = #tpu.pipeline_mode<synchronous>, transform_indices = @transform_7, window_bounds = array<i64: 4, 64, 32>}, {pipeline_mode = #tpu.pipeline_mode<synchronous>, transform_indices = @transform_8, window_bounds = array<i64: 1, 32>}, {pipeline_mode = #tpu.pipeline_mode<synchronous>, transform_indices = @transform_9, window_bounds = array<i64: 32, 16>}, {pipeline_mode = #tpu.pipeline_mode<synchronous>, transform_indices = @transform_10, window_bounds = array<i64: 1, 16>}, {transform_indices = @transform_11, window_bounds = array<i64: 1, 1, 8>}, {transform_indices = @transform_12, window_bounds = array<i64: 1, 1, 8>}]} {
    %c0 = arith.constant 0 : index
    %c0_0 = arith.constant 0 : index
    %c0_1 = arith.constant 0 : index
    %0 = vector.load %arg1[%c0, %c0_0, %c0_1] : memref<1x16x64xbf16, #tpu.memory_space<vmem>>, vector<1x16x64xbf16>
    %1 = vector.shape_cast %0 : vector<1x16x64xbf16> to vector<16x64xbf16>
    %cst = arith.constant 0.000000e+00 : f32
    %2 = vector.broadcast %cst : f32 to vector<8x64xf32>
    %c0_2 = arith.constant 0 : index
    %c0_3 = arith.constant 0 : index
    %c0_4 = arith.constant 0 : index
    %3 = vector.load %arg2[%c0_2, %c0_3, %c0_4] : memref<3x8x16xbf16, #tpu.memory_space<vmem>>, vector<1x8x16xbf16>
    %4 = vector.shape_cast %3 : vector<1x8x16xbf16> to vector<8x16xbf16>
    %cst_5 = arith.constant dense<0.000000e+00> : vector<8x64xf32>
    %5 = tpu.matmul %4, %1, %cst_5 {dimension_numbers = #tpu.dot_dimension_numbers<[1], [0], [0], [1], [0, 0, 1, 1], [], []>} : vector<8x16xbf16>, vector<16x64xbf16>, vector<8x64xf32> -> vector<8x64xf32>
    %6 = arith.truncf %5 : vector<8x64xf32> to vector<8x64xbf16>
    %c0_6 = arith.constant 0 : index
    %c0_7 = arith.constant 0 : index
    %c0_8 = arith.constant 0 : index
    %7 = vector.load %arg3[%c0_6, %c0_7, %c0_8] : memref<3x64x64xbf16, #tpu.memory_space<vmem>>, vector<1x64x64xbf16>
    %8 = vector.shape_cast %7 : vector<1x64x64xbf16> to vector<64x64xbf16>
    %cst_9 = arith.constant dense<0.000000e+00> : vector<8x64xf32>
    %9 = tpu.matmul %6, %8, %cst_9 {dimension_numbers = #tpu.dot_dimension_numbers<[1], [0], [0], [1], [0, 0, 1, 1], [], []>} : vector<8x64xbf16>, vector<64x64xbf16>, vector<8x64xf32> -> vector<8x64xf32>
    %10 = arith.addf %2, %9 : vector<8x64xf32>
    %c1 = arith.constant 1 : index
    %c0_10 = arith.constant 0 : index
    %c0_11 = arith.constant 0 : index
    %11 = vector.load %arg2[%c1, %c0_10, %c0_11] : memref<3x8x16xbf16, #tpu.memory_space<vmem>>, vector<1x8x16xbf16>
    %12 = vector.shape_cast %11 : vector<1x8x16xbf16> to vector<8x16xbf16>
    %cst_12 = arith.constant dense<0.000000e+00> : vector<8x64xf32>
    %13 = tpu.matmul %12, %1, %cst_12 {dimension_numbers = #tpu.dot_dimension_numbers<[1], [0], [0], [1], [0, 0, 1, 1], [], []>} : vector<8x16xbf16>, vector<16x64xbf16>, vector<8x64xf32> -> vector<8x64xf32>
    %14 = arith.truncf %13 : vector<8x64xf32> to vector<8x64xbf16>
    %c1_13 = arith.constant 1 : index
    %c0_14 = arith.constant 0 : index
    %c0_15 = arith.constant 0 : index
    %15 = vector.load %arg3[%c1_13, %c0_14, %c0_15] : memref<3x64x64xbf16, #tpu.memory_space<vmem>>, vector<1x64x64xbf16>
    %16 = vector.shape_cast %15 : vector<1x64x64xbf16> to vector<64x64xbf16>
    %cst_16 = arith.constant dense<0.000000e+00> : vector<8x64xf32>
    %17 = tpu.matmul %14, %16, %cst_16 {dimension_numbers = #tpu.dot_dimension_numbers<[1], [0], [0], [1], [0, 0, 1, 1], [], []>} : vector<8x64xbf16>, vector<64x64xbf16>, vector<8x64xf32> -> vector<8x64xf32>
    %18 = arith.addf %10, %17 : vector<8x64xf32>
    %c2 = arith.constant 2 : index
    %c0_17 = arith.constant 0 : index
    %c0_18 = arith.constant 0 : index
    %19 = vector.load %arg2[%c2, %c0_17, %c0_18] : memref<3x8x16xbf16, #tpu.memory_space<vmem>>, vector<1x8x16xbf16>
    %20 = vector.shape_cast %19 : vector<1x8x16xbf16> to vector<8x16xbf16>
    %cst_19 = arith.constant dense<0.000000e+00> : vector<8x64xf32>
    %21 = tpu.matmul %20, %1, %cst_19 {dimension_numbers = #tpu.dot_dimension_numbers<[1], [0], [0], [1], [0, 0, 1, 1], [], []>} : vector<8x16xbf16>, vector<16x64xbf16>, vector<8x64xf32> -> vector<8x64xf32>
    %22 = arith.truncf %21 : vector<8x64xf32> to vector<8x64xbf16>
    %c2_20 = arith.constant 2 : index
    %c0_21 = arith.constant 0 : index
    %c0_22 = arith.constant 0 : index
    %23 = vector.load %arg3[%c2_20, %c0_21, %c0_22] : memref<3x64x64xbf16, #tpu.memory_space<vmem>>, vector<1x64x64xbf16>
    %24 = vector.shape_cast %23 : vector<1x64x64xbf16> to vector<64x64xbf16>
    %cst_23 = arith.constant dense<0.000000e+00> : vector<8x64xf32>
    %25 = tpu.matmul %22, %24, %cst_23 {dimension_numbers = #tpu.dot_dimension_numbers<[1], [0], [0], [1], [0, 0, 1, 1], [], []>} : vector<8x64xbf16>, vector<64x64xbf16>, vector<8x64xf32> -> vector<8x64xf32>
    %26 = arith.addf %18, %25 : vector<8x64xf32>
    %c0_24 = arith.constant 0 : index
    %c0_25 = arith.constant 0 : index
    %27 = vector.load %arg4[%c0_24, %c0_25] : memref<1x64xf32, #tpu.memory_space<vmem>>, vector<1x64xf32>
    %28 = vector.broadcast %27 : vector<1x64xf32> to vector<8x64xf32>
    %29 = arith.addf %26, %28 : vector<8x64xf32>
    %cst_26 = arith.constant 0.000000e+00 : f32
    %30 = vector.broadcast %cst_26 : f32 to vector<8x64xf32>
    %31 = arith.maximumf %29, %30 : vector<8x64xf32>
    %32 = arith.truncf %31 : vector<8x64xf32> to vector<8x64xbf16>
    %cst_27 = arith.constant 0.000000e+00 : f32
    %33 = vector.broadcast %cst_27 : f32 to vector<4x64xf32>
    %c0_28 = arith.constant 0 : index
    %c0_29 = arith.constant 0 : index
    %c0_30 = arith.constant 0 : index
    %34 = vector.load %arg5[%c0_28, %c0_29, %c0_30] : memref<3x4x8xbf16, #tpu.memory_space<vmem>>, vector<1x4x8xbf16>
    %35 = vector.shape_cast %34 : vector<1x4x8xbf16> to vector<4x8xbf16>
    %cst_31 = arith.constant dense<0.000000e+00> : vector<4x64xf32>
    %36 = tpu.matmul %35, %32, %cst_31 {dimension_numbers = #tpu.dot_dimension_numbers<[1], [0], [0], [1], [0, 0, 1, 1], [], []>} : vector<4x8xbf16>, vector<8x64xbf16>, vector<4x64xf32> -> vector<4x64xf32>
    %37 = arith.truncf %36 : vector<4x64xf32> to vector<4x64xbf16>
    %c0_32 = arith.constant 0 : index
    %c0_33 = arith.constant 0 : index
    %c0_34 = arith.constant 0 : index
    %38 = vector.load %arg6[%c0_32, %c0_33, %c0_34] : memref<3x64x64xbf16, #tpu.memory_space<vmem>>, vector<1x64x64xbf16>
    %39 = vector.shape_cast %38 : vector<1x64x64xbf16> to vector<64x64xbf16>
    %cst_35 = arith.constant dense<0.000000e+00> : vector<4x64xf32>
    %40 = tpu.matmul %37, %39, %cst_35 {dimension_numbers = #tpu.dot_dimension_numbers<[1], [0], [0], [1], [0, 0, 1, 1], [], []>} : vector<4x64xbf16>, vector<64x64xbf16>, vector<4x64xf32> -> vector<4x64xf32>
    %41 = arith.addf %33, %40 : vector<4x64xf32>
    %c1_36 = arith.constant 1 : index
    %c0_37 = arith.constant 0 : index
    %c0_38 = arith.constant 0 : index
    %42 = vector.load %arg5[%c1_36, %c0_37, %c0_38] : memref<3x4x8xbf16, #tpu.memory_space<vmem>>, vector<1x4x8xbf16>
    %43 = vector.shape_cast %42 : vector<1x4x8xbf16> to vector<4x8xbf16>
    %cst_39 = arith.constant dense<0.000000e+00> : vector<4x64xf32>
    %44 = tpu.matmul %43, %32, %cst_39 {dimension_numbers = #tpu.dot_dimension_numbers<[1], [0], [0], [1], [0, 0, 1, 1], [], []>} : vector<4x8xbf16>, vector<8x64xbf16>, vector<4x64xf32> -> vector<4x64xf32>
    %45 = arith.truncf %44 : vector<4x64xf32> to vector<4x64xbf16>
    %c1_40 = arith.constant 1 : index
    %c0_41 = arith.constant 0 : index
    %c0_42 = arith.constant 0 : index
    %46 = vector.load %arg6[%c1_40, %c0_41, %c0_42] : memref<3x64x64xbf16, #tpu.memory_space<vmem>>, vector<1x64x64xbf16>
    %47 = vector.shape_cast %46 : vector<1x64x64xbf16> to vector<64x64xbf16>
    %cst_43 = arith.constant dense<0.000000e+00> : vector<4x64xf32>
    %48 = tpu.matmul %45, %47, %cst_43 {dimension_numbers = #tpu.dot_dimension_numbers<[1], [0], [0], [1], [0, 0, 1, 1], [], []>} : vector<4x64xbf16>, vector<64x64xbf16>, vector<4x64xf32> -> vector<4x64xf32>
    %49 = arith.addf %41, %48 : vector<4x64xf32>
    %c2_44 = arith.constant 2 : index
    %c0_45 = arith.constant 0 : index
    %c0_46 = arith.constant 0 : index
    %50 = vector.load %arg5[%c2_44, %c0_45, %c0_46] : memref<3x4x8xbf16, #tpu.memory_space<vmem>>, vector<1x4x8xbf16>
    %51 = vector.shape_cast %50 : vector<1x4x8xbf16> to vector<4x8xbf16>
    %cst_47 = arith.constant dense<0.000000e+00> : vector<4x64xf32>
    %52 = tpu.matmul %51, %32, %cst_47 {dimension_numbers = #tpu.dot_dimension_numbers<[1], [0], [0], [1], [0, 0, 1, 1], [], []>} : vector<4x8xbf16>, vector<8x64xbf16>, vector<4x64xf32> -> vector<4x64xf32>
    %53 = arith.truncf %52 : vector<4x64xf32> to vector<4x64xbf16>
    %c2_48 = arith.constant 2 : index
    %c0_49 = arith.constant 0 : index
    %c0_50 = arith.constant 0 : index
    %54 = vector.load %arg6[%c2_48, %c0_49, %c0_50] : memref<3x64x64xbf16, #tpu.memory_space<vmem>>, vector<1x64x64xbf16>
    %55 = vector.shape_cast %54 : vector<1x64x64xbf16> to vector<64x64xbf16>
    %cst_51 = arith.constant dense<0.000000e+00> : vector<4x64xf32>
    %56 = tpu.matmul %53, %55, %cst_51 {dimension_numbers = #tpu.dot_dimension_numbers<[1], [0], [0], [1], [0, 0, 1, 1], [], []>} : vector<4x64xbf16>, vector<64x64xbf16>, vector<4x64xf32> -> vector<4x64xf32>
    %57 = arith.addf %49, %56 : vector<4x64xf32>
    %c0_52 = arith.constant 0 : index
    %c0_53 = arith.constant 0 : index
    %58 = vector.load %arg7[%c0_52, %c0_53] : memref<1x64xf32, #tpu.memory_space<vmem>>, vector<1x64xf32>
    %59 = vector.broadcast %58 : vector<1x64xf32> to vector<4x64xf32>
    %60 = arith.addf %57, %59 : vector<4x64xf32>
    %cst_54 = arith.constant 0.000000e+00 : f32
    %61 = vector.broadcast %cst_54 : f32 to vector<4x64xf32>
    %62 = arith.maximumf %60, %61 : vector<4x64xf32>
    %63 = arith.truncf %62 : vector<4x64xf32> to vector<4x64xbf16>
    %cst_55 = arith.constant 0.000000e+00 : f32
    %64 = vector.broadcast %cst_55 : f32 to vector<1x32xf32>
    %65 = vector.extract_strided_slice %63 {offsets = [0, 0], sizes = [1, 64], strides = [1, 1]} : vector<4x64xbf16> to vector<1x64xbf16>
    %c0_56 = arith.constant 0 : index
    %c0_57 = arith.constant 0 : index
    %c0_58 = arith.constant 0 : index
    %66 = vector.load %arg8[%c0_56, %c0_57, %c0_58] : memref<4x64x32xbf16, #tpu.memory_space<vmem>>, vector<1x64x32xbf16>
    %67 = vector.shape_cast %66 : vector<1x64x32xbf16> to vector<64x32xbf16>
    %cst_59 = arith.constant dense<0.000000e+00> : vector<1x32xf32>
    %68 = tpu.matmul %65, %67, %cst_59 {dimension_numbers = #tpu.dot_dimension_numbers<[1], [0], [0], [1], [0, 0, 1, 1], [], []>} : vector<1x64xbf16>, vector<64x32xbf16>, vector<1x32xf32> -> vector<1x32xf32>
    %69 = arith.addf %64, %68 : vector<1x32xf32>
    %70 = vector.extract_strided_slice %63 {offsets = [1, 0], sizes = [1, 64], strides = [1, 1]} : vector<4x64xbf16> to vector<1x64xbf16>
    %c1_60 = arith.constant 1 : index
    %c0_61 = arith.constant 0 : index
    %c0_62 = arith.constant 0 : index
    %71 = vector.load %arg8[%c1_60, %c0_61, %c0_62] : memref<4x64x32xbf16, #tpu.memory_space<vmem>>, vector<1x64x32xbf16>
    %72 = vector.shape_cast %71 : vector<1x64x32xbf16> to vector<64x32xbf16>
    %cst_63 = arith.constant dense<0.000000e+00> : vector<1x32xf32>
    %73 = tpu.matmul %70, %72, %cst_63 {dimension_numbers = #tpu.dot_dimension_numbers<[1], [0], [0], [1], [0, 0, 1, 1], [], []>} : vector<1x64xbf16>, vector<64x32xbf16>, vector<1x32xf32> -> vector<1x32xf32>
    %74 = arith.addf %69, %73 : vector<1x32xf32>
    %75 = vector.extract_strided_slice %63 {offsets = [2, 0], sizes = [1, 64], strides = [1, 1]} : vector<4x64xbf16> to vector<1x64xbf16>
    %c2_64 = arith.constant 2 : index
    %c0_65 = arith.constant 0 : index
    %c0_66 = arith.constant 0 : index
    %76 = vector.load %arg8[%c2_64, %c0_65, %c0_66] : memref<4x64x32xbf16, #tpu.memory_space<vmem>>, vector<1x64x32xbf16>
    %77 = vector.shape_cast %76 : vector<1x64x32xbf16> to vector<64x32xbf16>
    %cst_67 = arith.constant dense<0.000000e+00> : vector<1x32xf32>
    %78 = tpu.matmul %75, %77, %cst_67 {dimension_numbers = #tpu.dot_dimension_numbers<[1], [0], [0], [1], [0, 0, 1, 1], [], []>} : vector<1x64xbf16>, vector<64x32xbf16>, vector<1x32xf32> -> vector<1x32xf32>
    %79 = arith.addf %74, %78 : vector<1x32xf32>
    %80 = vector.extract_strided_slice %63 {offsets = [3, 0], sizes = [1, 64], strides = [1, 1]} : vector<4x64xbf16> to vector<1x64xbf16>
    %c3 = arith.constant 3 : index
    %c0_68 = arith.constant 0 : index
    %c0_69 = arith.constant 0 : index
    %81 = vector.load %arg8[%c3, %c0_68, %c0_69] : memref<4x64x32xbf16, #tpu.memory_space<vmem>>, vector<1x64x32xbf16>
    %82 = vector.shape_cast %81 : vector<1x64x32xbf16> to vector<64x32xbf16>
    %cst_70 = arith.constant dense<0.000000e+00> : vector<1x32xf32>
    %83 = tpu.matmul %80, %82, %cst_70 {dimension_numbers = #tpu.dot_dimension_numbers<[1], [0], [0], [1], [0, 0, 1, 1], [], []>} : vector<1x64xbf16>, vector<64x32xbf16>, vector<1x32xf32> -> vector<1x32xf32>
    %84 = arith.addf %79, %83 : vector<1x32xf32>
    %c0_71 = arith.constant 0 : index
    %c0_72 = arith.constant 0 : index
    %85 = vector.load %arg9[%c0_71, %c0_72] : memref<1x32xf32, #tpu.memory_space<vmem>>, vector<1x32xf32>
    %86 = arith.addf %84, %85 : vector<1x32xf32>
    %cst_73 = arith.constant 0.000000e+00 : f32
    %87 = vector.broadcast %cst_73 : f32 to vector<1x32xf32>
    %88 = arith.maximumf %86, %87 : vector<1x32xf32>
    %89 = arith.truncf %88 : vector<1x32xf32> to vector<1x32xbf16>
    %c0_74 = arith.constant 0 : index
    %c0_75 = arith.constant 0 : index
    %90 = vector.load %arg10[%c0_74, %c0_75] : memref<32x16xbf16, #tpu.memory_space<vmem>>, vector<32x16xbf16>
    %cst_76 = arith.constant dense<0.000000e+00> : vector<1x16xf32>
    %91 = tpu.matmul %89, %90, %cst_76 {dimension_numbers = #tpu.dot_dimension_numbers<[1], [0], [0], [1], [0, 0, 1, 1], [], []>} : vector<1x32xbf16>, vector<32x16xbf16>, vector<1x16xf32> -> vector<1x16xf32>
    %c0_77 = arith.constant 0 : index
    %c0_78 = arith.constant 0 : index
    %92 = vector.load %arg11[%c0_77, %c0_78] : memref<1x16xf32, #tpu.memory_space<vmem>>, vector<1x16xf32>
    %93 = arith.addf %91, %92 : vector<1x16xf32>
    %94 = vector.extract_strided_slice %93 {offsets = [0, 0], sizes = [1, 8], strides = [1, 1]} : vector<1x16xf32> to vector<1x8xf32>
    %c0_79 = arith.constant 0 : index
    %c0_80 = arith.constant 0 : index
    %c0_81 = arith.constant 0 : index
    %95 = vector.load %arg12[%c0_79, %c0_80, %c0_81] : memref<1x1x8xf32, #tpu.memory_space<vmem>>, vector<1x1x8xf32>
    %96 = vector.shape_cast %95 : vector<1x1x8xf32> to vector<1x8xf32>
    %97 = vector.shape_cast %94 : vector<1x8xf32> to vector<1x1x8xf32>
    tpu.vector_store %arg12[%c0_79, %c0_80, %c0_81], %97 {strides = array<i32>} : memref<1x1x8xf32, #tpu.memory_space<vmem>>, vector<1x1x8xf32>,
    %98 = vector.extract_strided_slice %93 {offsets = [0, 8], sizes = [1, 8], strides = [1, 1]} : vector<1x16xf32> to vector<1x8xf32>
    %c0_82 = arith.constant 0 : index
    %c0_83 = arith.constant 0 : index
    %c0_84 = arith.constant 0 : index
    %99 = vector.load %arg13[%c0_82, %c0_83, %c0_84] : memref<1x1x8xf32, #tpu.memory_space<vmem>>, vector<1x1x8xf32>
    %100 = vector.shape_cast %99 : vector<1x1x8xf32> to vector<1x8xf32>
    %101 = vector.shape_cast %98 : vector<1x8xf32> to vector<1x1x8xf32>
    tpu.vector_store %arg13[%c0_82, %c0_83, %c0_84], %101 {strides = array<i32>} : memref<1x1x8xf32, #tpu.memory_space<vmem>>, vector<1x1x8xf32>,
    return
  }
  func.func @transform_0(%arg0: i32) -> (i32, i32, i32) {
    %c0_i32 = arith.constant 0 : i32
    %c0_i32_0 = arith.constant 0 : i32
    %c0_i32_1 = arith.constant 0 : i32
    return %arg0, %c0_i32, %c0_i32_0 : i32, i32, i32
  }
  func.func @transform_1(%arg0: i32) -> (i32, i32, i32) {
    %c0_i32 = arith.constant 0 : i32
    %c0_i32_0 = arith.constant 0 : i32
    %c0_i32_1 = arith.constant 0 : i32
    %c0_i32_2 = arith.constant 0 : i32
    return %c0_i32, %c0_i32_0, %c0_i32_1 : i32, i32, i32
  }
  func.func @transform_2(%arg0: i32) -> (i32, i32, i32) {
    %c0_i32 = arith.constant 0 : i32
    %c0_i32_0 = arith.constant 0 : i32
    %c0_i32_1 = arith.constant 0 : i32
    %c0_i32_2 = arith.constant 0 : i32
    return %c0_i32, %c0_i32_0, %c0_i32_1 : i32, i32, i32
  }
  func.func @transform_3(%arg0: i32) -> (i32, i32) {
    %c0_i32 = arith.constant 0 : i32
    %c0_i32_0 = arith.constant 0 : i32
    %c0_i32_1 = arith.constant 0 : i32
    return %c0_i32, %c0_i32_0 : i32, i32
  }
  func.func @transform_4(%arg0: i32) -> (i32, i32, i32) {
    %c0_i32 = arith.constant 0 : i32
    %c0_i32_0 = arith.constant 0 : i32
    %c0_i32_1 = arith.constant 0 : i32
    %c0_i32_2 = arith.constant 0 : i32
    return %c0_i32, %c0_i32_0, %c0_i32_1 : i32, i32, i32
  }
  func.func @transform_5(%arg0: i32) -> (i32, i32, i32) {
    %c0_i32 = arith.constant 0 : i32
    %c0_i32_0 = arith.constant 0 : i32
    %c0_i32_1 = arith.constant 0 : i32
    %c0_i32_2 = arith.constant 0 : i32
    return %c0_i32, %c0_i32_0, %c0_i32_1 : i32, i32, i32
  }
  func.func @transform_6(%arg0: i32) -> (i32, i32) {
    %c0_i32 = arith.constant 0 : i32
    %c0_i32_0 = arith.constant 0 : i32
    %c0_i32_1 = arith.constant 0 : i32
    return %c0_i32, %c0_i32_0 : i32, i32
  }
  func.func @transform_7(%arg0: i32) -> (i32, i32, i32) {
    %c0_i32 = arith.constant 0 : i32
    %c0_i32_0 = arith.constant 0 : i32
    %c0_i32_1 = arith.constant 0 : i32
    %c0_i32_2 = arith.constant 0 : i32
    return %c0_i32, %c0_i32_0, %c0_i32_1 : i32, i32, i32
  }
  func.func @transform_8(%arg0: i32) -> (i32, i32) {
    %c0_i32 = arith.constant 0 : i32
    %c0_i32_0 = arith.constant 0 : i32
    %c0_i32_1 = arith.constant 0 : i32
    return %c0_i32, %c0_i32_0 : i32, i32
  }
  func.func @transform_9(%arg0: i32) -> (i32, i32) {
    %c0_i32 = arith.constant 0 : i32
    %c0_i32_0 = arith.constant 0 : i32
    %c0_i32_1 = arith.constant 0 : i32
    return %c0_i32, %c0_i32_0 : i32, i32
  }
  func.func @transform_10(%arg0: i32) -> (i32, i32) {
    %c0_i32 = arith.constant 0 : i32
    %c0_i32_0 = arith.constant 0 : i32
    %c0_i32_1 = arith.constant 0 : i32
    return %c0_i32, %c0_i32_0 : i32, i32
  }
  func.func @transform_11(%arg0: i32) -> (i32, i32, i32) {
    %c0_i32 = arith.constant 0 : i32
    %c0_i32_0 = arith.constant 0 : i32
    %c0_i32_1 = arith.constant 0 : i32
    return %arg0, %c0_i32, %c0_i32_0 : i32, i32, i32
  }
  func.func @transform_12(%arg0: i32) -> (i32, i32, i32) {
    %c0_i32 = arith.constant 0 : i32
    %c0_i32_0 = arith.constant 0 : i32
    %c0_i32_1 = arith.constant 0 : i32
    return %arg0, %c0_i32, %c0_i32_0 : i32, i32, i32
  }
}

</mosaic_0001>

<llo_original>
// kernel: encoder_forward.1
$region0: #{encoder_forward.1}
  #allocation0 [shape = 'u32[]', space=smem, size = 0x4, offset = 0x4, fixed_abs, tag = 'smem constant byte address 0x4 - core index']
  #allocation1 [shape = 'u32[72,128]{1,0:T(1,128)}', space=vmem, size = 0x9000, scoped, tag = 'internal scratch']
  %s0 = inlined_call_operand.vmem [shape: bf16[2,16,64], index: 0, kind: input, shape index: {}]
  %s1 = inlined_call_operand.vmem [shape: bf16[3,8,16], index: 1, kind: input, shape index: {}]
  %s2 = inlined_call_operand.vmem [shape: bf16[3,64,64], index: 2, kind: input, shape index: {}]
  %s3 = inlined_call_operand.vmem [shape: f32[1,64], index: 3, kind: input, shape index: {}]
  %s4 = inlined_call_operand.vmem [shape: bf16[3,4,8], index: 4, kind: input, shape index: {}]
  %s5 = inlined_call_operand.vmem [shape: bf16[3,64,64], index: 5, kind: input, shape index: {}]
  %s6 = inlined_call_operand.vmem [shape: f32[1,64], index: 6, kind: input, shape index: {}]
  %s7 = inlined_call_operand.vmem [shape: bf16[4,64,32], index: 7, kind: input, shape index: {}]
  %s8 = inlined_call_operand.vmem [shape: f32[1,32], index: 8, kind: input, shape index: {}]
  %s9 = inlined_call_operand.vmem [shape: bf16[32,16], index: 9, kind: input, shape index: {}]
  %s10 = inlined_call_operand.vmem [shape: f32[1,16], index: 10, kind: input, shape index: {}]
  %s11 = inlined_call_operand.hbm [shape: f32[2,1,8], index: 11, kind: output, shape index: {0}]
  %s12 = inlined_call_operand.hbm [shape: f32[2,1,8], index: 12, kind: output, shape index: {1}]
  %13 = xla_tuple %s11, %s12
  %s14 = sld [smem:[#allocation0]]
  $region85: #{encoder_forward.1} parent=0
    _
  %s16 = ssub.s32 1, %s14
  %s17 = scalar_select 0, %s16, %s14
  $region1: #{encoder_forward.1} parent=0
    #allocation2 [shape = 'u8[1024]{0}', space=vmem, size = 0x400, scoped, tag = 'output window, operand 0']
    #allocation3 [shape = 's32[2]{0}', space=sflag, size = 0x8, scoped, tag = 'scoped memory for encoder_forward.1']
    #allocation4 [shape = 'u8[1024]{0}', space=vmem, size = 0x400, scoped, tag = 'output window, operand 1']
    #allocation5 [shape = 's32[2]{0}', space=sflag, size = 0x8, scoped, tag = 'scoped memory for encoder_forward.1']
    %18 = vsyncpa [#allocation3], 0
    %s19 = scalar_lea.sflag [#allocation3], 1
    %20 = vsyncpa %s19, 0
    %21 = vsyncpa [#allocation5], 0
    %s22 = scalar_lea.sflag [#allocation5], 1
    %23 = vsyncpa %s22, 0
    loop: start=0, step=1, limit=4
    $region2: #{encoder_forward.1} parent=1 // loop_pre_header
      _
    $region3: #{encoder_forward.1} parent=1 // loop_header
      %s25 = sphi 0, %s29
      %p26 = scmp.ge.s32.totalorder %s25, 4
      %s35 = sphi 0, %s37
      %s38 = sphi 0, %s35
      %s39 = sphi 0, %s38
      %s55 = sphi 0, %s39
      %s59 = sphi 0, %s59
      %s61 = sphi 0, %s59
      %s62 = sphi 0, %s61
      %s76 = sphi 0, %s62
      %s80 = sphi 0, %s80
      %s82 = sphi 0, %s80
      %s83 = sphi 0, %s82
      %s97 = sphi 0, %s83
      %s101 = sphi 0, %s101
      %s103 = sphi 0, %s101
      %s104 = sphi 0, %s103
      %s118 = sphi 0, %s104
      %s122 = sphi 0, %s122
      %s124 = sphi 0, %s122
      %s125 = sphi 0, %s124
      %s139 = sphi 0, %s125
      %s143 = sphi 0, %s143
      %s145 = sphi 0, %s143
      %s146 = sphi 0, %s145
      %s160 = sphi 0, %s146
      %s164 = sphi 0, %s164
      %s166 = sphi 0, %s164
      %s167 = sphi 0, %s166
      %s181 = sphi 0, %s167
      %s185 = sphi 0, %s185
      %s187 = sphi 0, %s185
      %s188 = sphi 0, %s187
      %s202 = sphi 0, %s188
      %s206 = sphi 0, %s206
      %s208 = sphi 0, %s206
      %s209 = sphi 0, %s208
      %s223 = sphi 0, %s209
      %s227 = sphi 0, %s227
      %s229 = sphi 0, %s227
      %s230 = sphi 0, %s229
      %s244 = sphi 0, %s230
      %s248 = sphi 0, %s248
      %s250 = sphi 0, %s248
      %s251 = sphi 0, %s250
      %s265 = sphi 0, %s251
      %s271 = sphi 0, %s273
      %s274 = sphi 0, %s271
      %s275 = sphi 0, %s274
      %s291 = sphi 0, %s275
      %s297 = sphi 0, %s299
      %s300 = sphi 0, %s297
      %s301 = sphi 0, %s300
      %s317 = sphi 0, %s301
    $region4: #{encoder_forward.1} parent=1 // loop_header_branch
      %28 = sbr.rel (%p26) target = $region8
    $region5: #{encoder_forward.1} parent=1 // loop_body
      %s30 = ssub.s32 %s25, 1
      %s31 = ssub.s32 %s25, 2
      %s32 = sadd.s32 %s25, 1
      %s33 = ssub.s32 %s25, %s32
      %p34 = scmp.eq.s32.totalorder %s33, 0
      %s36 = sadd.s32 %s35, 1
      %s37 = scalar_select %p34, %s35, %s36
      %p40 = pneg %p34
      %p41 = scmp.eq.s32.totalorder %s25, 1
      %p42 = por %p40, %p41
      %p43 = scmp.ne.s32.totalorder %s35, %s38
      %p44 = scmp.eq.s32.totalorder %s25, 0
      %p45 = por %p43, %p44
      %p46 = scmp.ne.s32.totalorder %s35, %s38
      %p47 = scmp.eq.s32.totalorder %s30, 1
      %p48 = por %p46, %p47
      %p49 = scmp.ne.s32.totalorder %s38, %s39
      %p50 = scmp.eq.s32.totalorder %s30, 0
      %p51 = por %p49, %p50
      %p52 = scmp.ne.s32.totalorder %s38, %s39
      %p53 = scmp.eq.s32.totalorder %s31, 1
      %p54 = por %p52, %p53
      %p56 = scmp.ne.s32.totalorder %s39, %s55
      %p57 = scmp.eq.s32.totalorder %s31, 0
      %p58 = por %p56, %p57
      %s60 = sadd.s32 %s59, 1
      %p63 = scmp.eq.s32.totalorder %s25, 1
      %p64 = scmp.ne.s32.totalorder %s59, %s61
      %p65 = scmp.eq.s32.totalorder %s25, 0
      %p66 = por %p64, %p65
      %p67 = scmp.ne.s32.totalorder %s59, %s61
      %p68 = scmp.eq.s32.totalorder %s30, 1
      %p69 = por %p67, %p68
      %p70 = scmp.ne.s32.totalorder %s61, %s62
      %p71 = scmp.eq.s32.totalorder %s30, 0
      %p72 = por %p70, %p71
      %p73 = scmp.ne.s32.totalorder %s61, %s62
      %p74 = scmp.eq.s32.totalorder %s31, 1
      %p75 = por %p73, %p74
      %p77 = scmp.ne.s32.totalorder %s62, %s76
      %p78 = scmp.eq.s32.totalorder %s31, 0
      %p79 = por %p77, %p78
      %s81 = sadd.s32 %s80, 1
      %p84 = scmp.eq.s32.totalorder %s25, 1
      %p85 = scmp.ne.s32.totalorder %s80, %s82
      %p86 = scmp.eq.s32.totalorder %s25, 0
      %p87 = por %p85, %p86
      %p88 = scmp.ne.s32.totalorder %s80, %s82
      %p89 = scmp.eq.s32.totalorder %s30, 1
      %p90 = por %p88, %p89
      %p91 = scmp.ne.s32.totalorder %s82, %s83
      %p92 = scmp.eq.s32.totalorder %s30, 0
      %p93 = por %p91, %p92
      %p94 = scmp.ne.s32.totalorder %s82, %s83
      %p95 = scmp.eq.s32.totalorder %s31, 1
      %p96 = por %p94, %p95
      %p98 = scmp.ne.s32.totalorder %s83, %s97
      %p99 = scmp.eq.s32.totalorder %s31, 0
      %p100 = por %p98, %p99
      %s102 = sadd.s32 %s101, 1
      %p105 = scmp.eq.s32.totalorder %s25, 1
      %p106 = scmp.ne.s32.totalorder %s101, %s103
      %p107 = scmp.eq.s32.totalorder %s25, 0
      %p108 = por %p106, %p107
      %p109 = scmp.ne.s32.totalorder %s101, %s103
      %p110 = scmp.eq.s32.totalorder %s30, 1
      %p111 = por %p109, %p110
      %p112 = scmp.ne.s32.totalorder %s103, %s104
      %p113 = scmp.eq.s32.totalorder %s30, 0
      %p114 = por %p112, %p113
      %p115 = scmp.ne.s32.totalorder %s103, %s104
      %p116 = scmp.eq.s32.totalorder %s31, 1
      %p117 = por %p115, %p116
      %p119 = scmp.ne.s32.totalorder %s104, %s118
      %p120 = scmp.eq.s32.totalorder %s31, 0
      %p121 = por %p119, %p120
      %s123 = sadd.s32 %s122, 1
      %p126 = scmp.eq.s32.totalorder %s25, 1
      %p127 = scmp.ne.s32.totalorder %s122, %s124
      %p128 = scmp.eq.s32.totalorder %s25, 0
      %p129 = por %p127, %p128
      %p130 = scmp.ne.s32.totalorder %s122, %s124
      %p131 = scmp.eq.s32.totalorder %s30, 1
      %p132 = por %p130, %p131
      %p133 = scmp.ne.s32.totalorder %s124, %s125
      %p134 = scmp.eq.s32.totalorder %s30, 0
      %p135 = por %p133, %p134
      %p136 = scmp.ne.s32.totalorder %s124, %s125
      %p137 = scmp.eq.s32.totalorder %s31, 1
      %p138 = por %p136, %p137
      %p140 = scmp.ne.s32.totalorder %s125, %s139
      %p141 = scmp.eq.s32.totalorder %s31, 0
      %p142 = por %p140, %p141
      %s144 = sadd.s32 %s143, 1
      %p147 = scmp.eq.s32.totalorder %s25, 1
      %p148 = scmp.ne.s32.totalorder %s143, %s145
      %p149 = scmp.eq.s32.totalorder %s25, 0
      %p150 = por %p148, %p149
      %p151 = scmp.ne.s32.totalorder %s143, %s145
      %p152 = scmp.eq.s32.totalorder %s30, 1
      %p153 = por %p151, %p152
      %p154 = scmp.ne.s32.totalorder %s145, %s146
      %p155 = scmp.eq.s32.totalorder %s30, 0
      %p156 = por %p154, %p155
      %p157 = scmp.ne.s32.totalorder %s145, %s146
      %p158 = scmp.eq.s32.totalorder %s31, 1
      %p159 = por %p157, %p158
      %p161 = scmp.ne.s32.totalorder %s146, %s160
      %p162 = scmp.eq.s32.totalorder %s31, 0
      %p163 = por %p161, %p162
      %s165 = sadd.s32 %s164, 1
      %p168 = scmp.eq.s32.totalorder %s25, 1
      %p169 = scmp.ne.s32.totalorder %s164, %s166
      %p170 = scmp.eq.s32.totalorder %s25, 0
      %p171 = por %p169, %p170
      %p172 = scmp.ne.s32.totalorder %s164, %s166
      %p173 = scmp.eq.s32.totalorder %s30, 1
      %p174 = por %p172, %p173
      %p175 = scmp.ne.s32.totalorder %s166, %s167
      %p176 = scmp.eq.s32.totalorder %s30, 0
      %p177 = por %p175, %p176
      %p178 = scmp.ne.s32.totalorder %s166, %s167
      %p179 = scmp.eq.s32.totalorder %s31, 1
      %p180 = por %p178, %p179
      %p182 = scmp.ne.s32.totalorder %s167, %s181
      %p183 = scmp.eq.s32.totalorder %s31, 0
      %p184 = por %p182, %p183
      %s186 = sadd.s32 %s185, 1
      %p189 = scmp.eq.s32.totalorder %s25, 1
      %p190 = scmp.ne.s32.totalorder %s185, %s187
      %p191 = scmp.eq.s32.totalorder %s25, 0
      %p192 = por %p190, %p191
      %p193 = scmp.ne.s32.totalorder %s185, %s187
      %p194 = scmp.eq.s32.totalorder %s30, 1
      %p195 = por %p193, %p194
      %p196 = scmp.ne.s32.totalorder %s187, %s188
      %p197 = scmp.eq.s32.totalorder %s30, 0
      %p198 = por %p196, %p197
      %p199 = scmp.ne.s32.totalorder %s187, %s188
      %p200 = scmp.eq.s32.totalorder %s31, 1
      %p201 = por %p199, %p200
      %p203 = scmp.ne.s32.totalorder %s188, %s202
      %p204 = scmp.eq.s32.totalorder %s31, 0
      %p205 = por %p203, %p204
      %s207 = sadd.s32 %s206, 1
      %p210 = scmp.eq.s32.totalorder %s25, 1
      %p211 = scmp.ne.s32.totalorder %s206, %s208
      %p212 = scmp.eq.s32.totalorder %s25, 0
      %p213 = por %p211, %p212
      %p214 = scmp.ne.s32.totalorder %s206, %s208
      %p215 = scmp.eq.s32.totalorder %s30, 1
      %p216 = por %p214, %p215
      %p217 = scmp.ne.s32.totalorder %s208, %s209
      %p218 = scmp.eq.s32.totalorder %s30, 0
      %p219 = por %p217, %p218
      %p220 = scmp.ne.s32.totalorder %s208, %s209
      %p221 = scmp.eq.s32.totalorder %s31, 1
      %p222 = por %p220, %p221
      %p224 = scmp.ne.s32.totalorder %s209, %s223
      %p225 = scmp.eq.s32.totalorder %s31, 0
      %p226 = por %p224, %p225
      %s228 = sadd.s32 %s227, 1
      %p231 = scmp.eq.s32.totalorder %s25, 1
      %p232 = scmp.ne.s32.totalorder %s227, %s229
      %p233 = scmp.eq.s32.totalorder %s25, 0
      %p234 = por %p232, %p233
      %p235 = scmp.ne.s32.totalorder %s227, %s229
      %p236 = scmp.eq.s32.totalorder %s30, 1
      %p237 = por %p235, %p236
      %p238 = scmp.ne.s32.totalorder %s229, %s230
      %p239 = scmp.eq.s32.totalorder %s30, 0
      %p240 = por %p238, %p239
      %p241 = scmp.ne.s32.totalorder %s229, %s230
      %p242 = scmp.eq.s32.totalorder %s31, 1
      %p243 = por %p241, %p242
      %p245 = scmp.ne.s32.totalorder %s230, %s244
      %p246 = scmp.eq.s32.totalorder %s31, 0
      %p247 = por %p245, %p246
      %s249 = sadd.s32 %s248, 1
      %p252 = scmp.eq.s32.totalorder %s25, 1
      %p253 = scmp.ne.s32.totalorder %s248, %s250
      %p254 = scmp.eq.s32.totalorder %s25, 0
      %p255 = por %p253, %p254
      %p256 = scmp.ne.s32.totalorder %s248, %s250
      %p257 = scmp.eq.s32.totalorder %s30, 1
      %p258 = por %p256, %p257
      %p259 = scmp.ne.s32.totalorder %s250, %s251
      %p260 = scmp.eq.s32.totalorder %s30, 0
      %p261 = por %p259, %p260
      %p262 = scmp.ne.s32.totalorder %s250, %s251
      %p263 = scmp.eq.s32.totalorder %s31, 1
      %p264 = por %p262, %p263
      %p266 = scmp.ne.s32.totalorder %s251, %s265
      %p267 = scmp.eq.s32.totalorder %s31, 0
      %p268 = por %p266, %p267
      %s269 = ssub.s32 %s25, %s32
      %p270 = scmp.eq.s32.totalorder %s269, 0
      %s272 = sadd.s32 %s271, 1
      %s273 = scalar_select %p270, %s271, %s272
      %p276 = pneg %p270
      %p277 = scmp.eq.s32.totalorder %s25, 1
      %p278 = por %p276, %p277
      %p279 = scmp.ne.s32.totalorder %s271, %s274
      %p280 = scmp.eq.s32.totalorder %s25, 0
      %p281 = por %p279, %p280
      %p282 = scmp.ne.s32.totalorder %s271, %s274
      %p283 = scmp.eq.s32.totalorder %s30, 1
      %p284 = por %p282, %p283
      %p285 = scmp.ne.s32.totalorder %s274, %s275
      %p286 = scmp.eq.s32.totalorder %s30, 0
      %p287 = por %p285, %p286
      %p288 = scmp.ne.s32.totalorder %s274, %s275
      %p289 = scmp.eq.s32.totalorder %s31, 1
      %p290 = por %p288, %p289
      %p292 = scmp.ne.s32.totalorder %s275, %s291
      %p293 = scmp.eq.s32.totalorder %s31, 0
      %p294 = por %p292, %p293
      %s295 = ssub.s32 %s25, %s32
      %p296 = scmp.eq.s32.totalorder %s295, 0
      %s298 = sadd.s32 %s297, 1
      %s299 = scalar_select %p296, %s297, %s298
      %p302 = pneg %p296
      %p303 = scmp.eq.s32.totalorder %s25, 1
      %p304 = por %p302, %p303
      %p305 = scmp.ne.s32.totalorder %s297, %s300
      %p306 = scmp.eq.s32.totalorder %s25, 0
      %p307 = por %p305, %p306
      %p308 = scmp.ne.s32.totalorder %s297, %s300
      %p309 = scmp.eq.s32.totalorder %s30, 1
      %p310 = por %p308, %p309
      %p311 = scmp.ne.s32.totalorder %s300, %s301
      %p312 = scmp.eq.s32.totalorder %s30, 0
      %p313 = por %p311, %p312
      %p314 = scmp.ne.s32.totalorder %s300, %s301
      %p315 = scmp.eq.s32.totalorder %s31, 1
      %p316 = por %p314, %p315
      %p318 = scmp.ne.s32.totalorder %s301, %s317
      %p319 = scmp.eq.s32.totalorder %s31, 0
      %p320 = por %p318, %p319
      %p321 = scmp.le.s32.totalorder 1, %s25
      %p322 = scmp.lt.s32.totalorder %s25, 3
      %p323 = pnand %p321, %p322
      %p324 = pneg %p323
      // Predicated region
      $region9: #{encoder_forward.1} parent=5 // pred_check
        _
      $region10: #{encoder_forward.1} parent=5 // pred_check_branch
        %326 = sbr.rel (%p323) target = $region12
      $region11: #{encoder_forward.1} parent=5 // pred_region
        %s327 = ssub.s32 %s25, 1
        // Predicated region
        $region13: #{encoder_forward.1} parent=11 // pred_check
          %p328 = pneg %p72
        $region14: #{encoder_forward.1} parent=11 // pred_check_branch
          %330 = sbr.rel (%p328) target = $region16
        $region15: #{encoder_forward.1} parent=11 // pred_region
          _
        $region16: #{encoder_forward.1} parent=11 // pred_fallthru
          _
        // Predicated region
        $region17: #{encoder_forward.1} parent=11 // pred_check
          %p331 = pneg %p93
        $region18: #{encoder_forward.1} parent=11 // pred_check_branch
          %333 = sbr.rel (%p331) target = $region20
        $region19: #{encoder_forward.1} parent=11 // pred_region
          _
        $region20: #{encoder_forward.1} parent=11 // pred_fallthru
          _
        // Predicated region
        $region21: #{encoder_forward.1} parent=11 // pred_check
          %p334 = pneg %p114
        $region22: #{encoder_forward.1} parent=11 // pred_check_branch
          %336 = sbr.rel (%p334) target = $region24
        $region23: #{encoder_forward.1} parent=11 // pred_region
          _
        $region24: #{encoder_forward.1} parent=11 // pred_fallthru
          _
        // Predicated region
        $region25: #{encoder_forward.1} parent=11 // pred_check
          %p337 = pneg %p135
        $region26: #{encoder_forward.1} parent=11 // pred_check_branch
          %339 = sbr.rel (%p337) target = $region28
        $region27: #{encoder_forward.1} parent=11 // pred_region
          _
        $region28: #{encoder_forward.1} parent=11 // pred_fallthru
          _
        // Predicated region
        $region29: #{encoder_forward.1} parent=11 // pred_check
          %p340 = pneg %p156
        $region30: #{encoder_forward.1} parent=11 // pred_check_branch
          %342 = sbr.rel (%p340) target = $region32
        $region31: #{encoder_forward.1} parent=11 // pred_region
          _
        $region32: #{encoder_forward.1} parent=11 // pred_fallthru
          _
        // Predicated region
        $region33: #{encoder_forward.1} parent=11 // pred_check
          %p343 = pneg %p177
        $region34: #{encoder_forward.1} parent=11 // pred_check_branch
          %345 = sbr.rel (%p343) target = $region36
        $region35: #{encoder_forward.1} parent=11 // pred_region
          _
        $region36: #{encoder_forward.1} parent=11 // pred_fallthru
          _
        // Predicated region
        $region37: #{encoder_forward.1} parent=11 // pred_check
          %p346 = pneg %p198
        $region38: #{encoder_forward.1} parent=11 // pred_check_branch
          %348 = sbr.rel (%p346) target = $region40
        $region39: #{encoder_forward.1} parent=11 // pred_region
          _
        $region40: #{encoder_forward.1} parent=11 // pred_fallthru
          _
        // Predicated region
        $region41: #{encoder_forward.1} parent=11 // pred_check
          %p349 = pneg %p219
        $region42: #{encoder_forward.1} parent=11 // pred_check_branch
          %351 = sbr.rel (%p349) target = $region44
        $region43: #{encoder_forward.1} parent=11 // pred_region
          _
        $region44: #{encoder_forward.1} parent=11 // pred_fallthru
          _
        // Predicated region
        $region45: #{encoder_forward.1} parent=11 // pred_check
          %p352 = pneg %p240
        $region46: #{encoder_forward.1} parent=11 // pred_check_branch
          %354 = sbr.rel (%p352) target = $region48
        $region47: #{encoder_forward.1} parent=11 // pred_region
          _
        $region48: #{encoder_forward.1} parent=11 // pred_fallthru
          _
        // Predicated region
        $region49: #{encoder_forward.1} parent=11 // pred_check
          %p355 = pneg %p261
        $region50: #{encoder_forward.1} parent=11 // pred_check_branch
          %357 = sbr.rel (%p355) target = $region52
        $region51: #{encoder_forward.1} parent=11 // pred_region
          _
        $region52: #{encoder_forward.1} parent=11 // pred_fallthru
          _
      $region12: #{encoder_forward.1} parent=5 // pred_fallthru
        _
      %p358 = scmp.lt.s32.totalorder %s25, 2
      // Predicated region
      $region53: #{encoder_forward.1} parent=5 // pred_check
        %p359 = pneg %p358
      $region54: #{encoder_forward.1} parent=5 // pred_check_branch
        %361 = sbr.rel (%p359) target = $region56
      $region55: #{encoder_forward.1} parent=5 // pred_region
        // Predicated region
        $region57: #{encoder_forward.1} parent=55 // pred_check
          %p362 = pneg %p45
        $region58: #{encoder_forward.1} parent=55 // pred_check_branch
          %364 = sbr.rel (%p362) target = $region60
        $region59: #{encoder_forward.1} parent=55 // pred_region
          %p365 = scmp.lt.s32.totalorder %s25, 1
          %s366 = scalar_select %p365, %s25, 1
          %s367 = smul.addr %s366, 2
          %s368 = smul.addr %s367, 4
          %s369 = scalar_lea.vmem %s0, %s368
        $region60: #{encoder_forward.1} parent=55 // pred_fallthru
          _
      $region56: #{encoder_forward.1} parent=5 // pred_fallthru
        _
      %p370 = scmp.le.s32.totalorder 1, %s25
      %p371 = scmp.lt.s32.totalorder %s25, 3
      %p372 = pnand %p370, %p371
      %p373 = pneg %p372
      // Predicated region
      $region61: #{encoder_forward.1} parent=5 // pred_check
        _
      $region62: #{encoder_forward.1} parent=5 // pred_check_branch
        %375 = sbr.rel (%p372) target = $region64
      $region63: #{encoder_forward.1} parent=5 // pred_region
        %s376 = ssub.s32 %s25, 1
        %p377 = scmp.lt.s32.totalorder %s30, 1
        %s378 = scalar_select %p377, %s30, 1
        %s379 = smul.addr %s378, 2
        %s380 = smul.addr %s379, 4
        %s381 = scalar_lea.vmem %s0, %s380
        %p382 = pneg %p51
        %p383 = pneg %p48
        %p384 = pneg %p72
        %p385 = pneg %p69
        %p386 = pneg %p93
        %p387 = pneg %p90
        %p388 = pneg %p114
        %p389 = pneg %p111
        %p390 = pneg %p135
        %p391 = pneg %p132
        %p392 = pneg %p156
        %p393 = pneg %p153
        %p394 = pneg %p177
        %p395 = pneg %p174
        %p396 = pneg %p198
        %p397 = pneg %p195
        %p398 = pneg %p219
        %p399 = pneg %p216
        %p400 = pneg %p240
        %p401 = pneg %p237
        %p402 = pneg %p261
        %p403 = pneg %p258
        %p404 = pneg %p287
        %p405 = pneg %p284
        %s406 = sand.u32 %s274, 1
        %s407 = scalar_lea.sflag [#allocation3], %s406
        %s408 = sand.u32 %s274, 1
        %s409 = scalar_lea.vmem [#allocation2], %s408
        %p410 = pneg %p313
        %p411 = pneg %p310
        %s412 = sand.u32 %s300, 1
        %s413 = scalar_lea.sflag [#allocation5], %s412
        %s414 = sand.u32 %s300, 1
        %s415 = scalar_lea.vmem [#allocation4], %s414
        %p416 = scmp.lt.s32.totalorder %s30, 1
        %s417 = scalar_select %p416, %s30, 1
        %s418 = smul.addr %s417, 2
        %s419 = smul.addr %s418, 4
        %s420 = scalar_lea.vmem %s0, %s419
        %v422 = vld [vmem:[%s420] sm:$0xf]
        %v423 = vld [vmem:[%s420 + $0x4] sm:$0xf]
        %v424 = vld [vmem:[%s1] sm:$0xf]
        %v427 = vunpack.c.l.b16 %v422
        %v428 = vunpack.c.l.b16 %v423
        %v429 = vpack.c.b16 %v428, %v427
        %vm431 = vcmask 130048
        %v433 = vsel %vm431, %v424, 0
        %435 = vmatpush.bf16.msra.mxu0 0
        %436 = vmatpush.bf16.msra.mxu0 0
        %437 = vmatpush.bf16.msra.mxu0 0
        %438 = vmatpush.bf16.msra.mxu0 0
        %439 = vmatpush.bf16.msra.mxu0 0
        %440 = vmatpush.bf16.msra.mxu0 0
        %441 = vmatpush.bf16.msra.mxu0 0
        %442 = vmatpush.bf16.msra.mxu0 %v429
        %443 = vmatmul.bf16.gmra.mxu0 %v433
        %v444 = vpop.f32.mrf.mxu0
        %v445 = vadd.f32 0.0, %v444
        %v446 = vpop.f32.mrf.mxu0
        %447 = vdwg.mxu0
        %v448 = vpack.c.bf16 %v445, %v445
        %v449 = vld [vmem:[%s2] sm:$0xf]
        %v450 = vld [vmem:[%s2 + $0x4] sm:$0xf]
        %v451 = vld [vmem:[%s2 + $0x8] sm:$0xf]
        %v452 = vld [vmem:[%s2 + $0xc] sm:$0xf]
        %v453 = vld [vmem:[%s2 + $0x10] sm:$0xf]
        %v454 = vld [vmem:[%s2 + $0x14] sm:$0xf]
        %v455 = vld [vmem:[%s2 + $0x18] sm:$0xf]
        %v456 = vld [vmem:[%s2 + $0x1c] sm:$0xf]
        %s457 = scalar_lea.vmem %s1, 4
        %v458 = vld [vmem:[%s457] sm:$0xf]
        %v460 = vsel %vm431, %v458, 0
        %462 = vmatpush.bf16.msra.mxu0 0
        %463 = vmatpush.bf16.msra.mxu0 0
        %464 = vmatpush.bf16.msra.mxu0 0
        %465 = vmatpush.bf16.msra.mxu0 0
        %466 = vmatpush.bf16.msra.mxu0 0
        %467 = vmatpush.bf16.msra.mxu0 0
        %468 = vmatpush.bf16.msra.mxu0 0
        %469 = vmatpush.bf16.msra.mxu0 %v429
        %470 = vmatmul.bf16.gmra.mxu0 %v460
        %v471 = vpop.f32.mrf.mxu0
        %v472 = vadd.f32 0.0, %v471
        %v473 = vpop.f32.mrf.mxu0
        %474 = vdwg.mxu0
        %v475 = vpack.c.bf16 %v472, %v472
        %s476 = scalar_lea.vmem %s2, 32
        %v477 = vld [vmem:[%s476] sm:$0xf]
        %v478 = vld [vmem:[%s476 + $0x4] sm:$0xf]
        %v479 = vld [vmem:[%s476 + $0x8] sm:$0xf]
        %v480 = vld [vmem:[%s476 + $0xc] sm:$0xf]
        %v481 = vld [vmem:[%s476 + $0x10] sm:$0xf]
        %v482 = vld [vmem:[%s476 + $0x14] sm:$0xf]
        %v483 = vld [vmem:[%s476 + $0x18] sm:$0xf]
        %v484 = vld [vmem:[%s476 + $0x1c] sm:$0xf]
        %v493 = vunpack.c.l.b16 %v477
        %v494 = vunpack.c.l.b16 %v478
        %v495 = vunpack.c.l.b16 %v479
        %v496 = vunpack.c.l.b16 %v480
        %v497 = vunpack.c.l.b16 %v481
        %v498 = vunpack.c.l.b16 %v482
        %v499 = vunpack.c.l.b16 %v483
        %v500 = vunpack.c.l.b16 %v484
        %v501 = vpack.c.b16 %v494, %v493
        %v502 = vpack.c.b16 %v496, %v495
        %v503 = vpack.c.b16 %v498, %v497
        %v504 = vpack.c.b16 %v500, %v499
        %vm509 = vcmask 523264
        %v511 = vsel %vm509, %v475, 0
        %513 = vmatpush.bf16.msra.mxu0 0
        %514 = vmatpush.bf16.msra.mxu0 0
        %515 = vmatpush.bf16.msra.mxu0 0
        %516 = vmatpush.bf16.msra.mxu0 0
        %517 = vmatpush.bf16.msra.mxu0 %v504
        %518 = vmatpush.bf16.msra.mxu0 %v503
        %519 = vmatpush.bf16.msra.mxu0 %v502
        %520 = vmatpush.bf16.msra.mxu0 %v501
        %521 = vmatmul.bf16.gmra.mxu0 %v511
        %v522 = vpop.f32.mrf.mxu0
        %v523 = vadd.f32 0.0, %v522
        %v524 = vpop.f32.mrf.mxu0
        %525 = vdwg.mxu0
        %v534 = vunpack.c.l.b16 %v449
        %v535 = vunpack.c.l.b16 %v450
        %v536 = vunpack.c.l.b16 %v451
        %v537 = vunpack.c.l.b16 %v452
        %v538 = vunpack.c.l.b16 %v453
        %v539 = vunpack.c.l.b16 %v454
        %v540 = vunpack.c.l.b16 %v455
        %v541 = vunpack.c.l.b16 %v456
        %v542 = vpack.c.b16 %v535, %v534
        %v543 = vpack.c.b16 %v537, %v536
        %v544 = vpack.c.b16 %v539, %v538
        %v545 = vpack.c.b16 %v541, %v540
        %v551 = vsel %vm509, %v448, 0
        %553 = vmatpush.bf16.msra.mxu0 0
        %554 = vmatpush.bf16.msra.mxu0 0
        %555 = vmatpush.bf16.msra.mxu0 0
        %556 = vmatpush.bf16.msra.mxu0 0
        %557 = vmatpush.bf16.msra.mxu0 %v545
        %558 = vmatpush.bf16.msra.mxu0 %v544
        %559 = vmatpush.bf16.msra.mxu0 %v543
        %560 = vmatpush.bf16.msra.mxu0 %v542
        %561 = vmatmul.bf16.gmra.mxu0 %v551
        %v562 = vpop.f32.mrf.mxu0
        %v563 = vadd.f32 %v523, %v562
        %v564 = vpop.f32.mrf.mxu0
        %565 = vdwg.mxu0
        %s566 = scalar_lea.vmem %s1, 8
        %v567 = vld [vmem:[%s566] sm:$0xf]
        %v569 = vsel %vm431, %v567, 0
        %571 = vmatpush.bf16.msra.mxu0 0
        %572 = vmatpush.bf16.msra.mxu0 0
        %573 = vmatpush.bf16.msra.mxu0 0
        %574 = vmatpush.bf16.msra.mxu0 0
        %575 = vmatpush.bf16.msra.mxu0 0
        %576 = vmatpush.bf16.msra.mxu0 0
        %577 = vmatpush.bf16.msra.mxu0 0
        %578 = vmatpush.bf16.msra.mxu0 %v429
        %579 = vmatmul.bf16.gmra.mxu0 %v569
        %v580 = vpop.f32.mrf.mxu0
        %v581 = vadd.f32 0.0, %v580
        %v582 = vpop.f32.mrf.mxu0
        %583 = vdwg.mxu0
        %v584 = vpack.c.bf16 %v581, %v581
        %s585 = scalar_lea.vmem %s2, 64
        %v586 = vld [vmem:[%s585] sm:$0xf]
        %v587 = vld [vmem:[%s585 + $0x4] sm:$0xf]
        %v588 = vld [vmem:[%s585 + $0x8] sm:$0xf]
        %v589 = vld [vmem:[%s585 + $0xc] sm:$0xf]
        %v590 = vld [vmem:[%s585 + $0x10] sm:$0xf]
        %v591 = vld [vmem:[%s585 + $0x14] sm:$0xf]
        %v592 = vld [vmem:[%s585 + $0x18] sm:$0xf]
        %v593 = vld [vmem:[%s585 + $0x1c] sm:$0xf]
        %v602 = vunpack.c.l.b16 %v586
        %v603 = vunpack.c.l.b16 %v587
        %v604 = vunpack.c.l.b16 %v588
        %v605 = vunpack.c.l.b16 %v589
        %v606 = vunpack.c.l.b16 %v590
        %v607 = vunpack.c.l.b16 %v591
        %v608 = vunpack.c.l.b16 %v592
        %v609 = vunpack.c.l.b16 %v593
        %v610 = vpack.c.b16 %v603, %v602
        %v611 = vpack.c.b16 %v605, %v604
        %v612 = vpack.c.b16 %v607, %v606
        %v613 = vpack.c.b16 %v609, %v608
        %v619 = vsel %vm509, %v584, 0
        %621 = vmatpush.bf16.msra.mxu0 0
        %622 = vmatpush.bf16.msra.mxu0 0
        %623 = vmatpush.bf16.msra.mxu0 0
        %624 = vmatpush.bf16.msra.mxu0 0
        %625 = vmatpush.bf16.msra.mxu0 %v613
        %626 = vmatpush.bf16.msra.mxu0 %v612
        %627 = vmatpush.bf16.msra.mxu0 %v611
        %628 = vmatpush.bf16.msra.mxu0 %v610
        %629 = vmatmul.bf16.gmra.mxu0 %v619
        %v630 = vpop.f32.mrf.mxu0
        %v631 = vadd.f32 0.0, %v630
        %v632 = vpop.f32.mrf.mxu0
        %633 = vdwg.mxu0
        %v634 = vadd.f32 %v563, %v631
        %v635 = vld [vmem:[%s3] sm:$0x1]
        %v637 = vperm.slane %v635, 0
        %v639 = vadd.f32 %v634, %v637
        %v640 = vmax.f32 %v639, 0.0
        %v641 = vpack.c.bf16 %v640, %v640
        %v642 = vld [vmem:[%s4] sm:$0x3]
        %vm643 = vcmask 64512
        %v645 = vsel %vm643, %v642, 0
        %vm647 = vcmask 1043456
        %v649 = vsel %vm647, %v641, 0
        %651 = vmatpush.bf16.msra.mxu0 0
        %652 = vmatpush.bf16.msra.mxu0 0
        %653 = vmatpush.bf16.msra.mxu0 0
        %654 = vmatpush.bf16.msra.mxu0 0
        %655 = vmatpush.bf16.msra.mxu0 0
        %656 = vmatpush.bf16.msra.mxu0 0
        %657 = vmatpush.bf16.msra.mxu0 0
        %658 = vmatpush.bf16.msra.mxu0 %v649
        %659 = vmatmul.bf16.gmra.mxu0 %v645
        %v660 = vpop.f32.mrf.mxu0
        %v661 = vadd.f32 0.0, %v660
        %v662 = vpop.f32.mrf.mxu0
        %663 = vdwg.mxu0
        %v664 = vpack.c.bf16 %v661, %v661
        %v665 = vld [vmem:[%s5] sm:$0xf]
        %v666 = vld [vmem:[%s5 + $0x4] sm:$0xf]
        %v667 = vld [vmem:[%s5 + $0x8] sm:$0xf]
        %v668 = vld [vmem:[%s5 + $0xc] sm:$0xf]
        %v669 = vld [vmem:[%s5 + $0x10] sm:$0xf]
        %v670 = vld [vmem:[%s5 + $0x14] sm:$0xf]
        %v671 = vld [vmem:[%s5 + $0x18] sm:$0xf]
        %v672 = vld [vmem:[%s5 + $0x1c] sm:$0xf]
        %s673 = scalar_lea.vmem %s4, 2
        %v674 = vld [vmem:[%s673] sm:$0x3]
        %v676 = vsel %vm643, %v674, 0
        %678 = vmatpush.bf16.msra.mxu0 0
        %679 = vmatpush.bf16.msra.mxu0 0
        %680 = vmatpush.bf16.msra.mxu0 0
        %681 = vmatpush.bf16.msra.mxu0 0
        %682 = vmatpush.bf16.msra.mxu0 0
        %683 = vmatpush.bf16.msra.mxu0 0
        %684 = vmatpush.bf16.msra.mxu0 0
        %685 = vmatpush.bf16.msra.mxu0 %v649
        %686 = vmatmul.bf16.gmra.mxu0 %v676
        %v687 = vpop.f32.mrf.mxu0
        %v688 = vadd.f32 0.0, %v687
        %v689 = vpop.f32.mrf.mxu0
        %690 = vdwg.mxu0
        %v691 = vpack.c.bf16 %v688, %v688
        %s692 = scalar_lea.vmem %s5, 32
        %v693 = vld [vmem:[%s692] sm:$0xf]
        %v694 = vld [vmem:[%s692 + $0x4] sm:$0xf]
        %v695 = vld [vmem:[%s692 + $0x8] sm:$0xf]
        %v696 = vld [vmem:[%s692 + $0xc] sm:$0xf]
        %v697 = vld [vmem:[%s692 + $0x10] sm:$0xf]
        %v698 = vld [vmem:[%s692 + $0x14] sm:$0xf]
        %v699 = vld [vmem:[%s692 + $0x18] sm:$0xf]
        %v700 = vld [vmem:[%s692 + $0x1c] sm:$0xf]
        %v709 = vunpack.c.l.b16 %v693
        %v710 = vunpack.c.l.b16 %v694
        %v711 = vunpack.c.l.b16 %v695
        %v712 = vunpack.c.l.b16 %v696
        %v713 = vunpack.c.l.b16 %v697
        %v714 = vunpack.c.l.b16 %v698
        %v715 = vunpack.c.l.b16 %v699
        %v716 = vunpack.c.l.b16 %v700
        %v717 = vpack.c.b16 %v710, %v709
        %v718 = vpack.c.b16 %v712, %v711
        %v719 = vpack.c.b16 %v714, %v713
        %v720 = vpack.c.b16 %v716, %v715
        %v726 = vsel %vm509, %v691, 0
        %728 = vmatpush.bf16.msra.mxu0 0
        %729 = vmatpush.bf16.msra.mxu0 0
        %730 = vmatpush.bf16.msra.mxu0 0
        %731 = vmatpush.bf16.msra.mxu0 0
        %732 = vmatpush.bf16.msra.mxu0 %v720
        %733 = vmatpush.bf16.msra.mxu0 %v719
        %734 = vmatpush.bf16.msra.mxu0 %v718
        %735 = vmatpush.bf16.msra.mxu0 %v717
        %736 = vmatmul.bf16.gmra.mxu0 %v726
        %v737 = vpop.f32.mrf.mxu0
        %v738 = vadd.f32 0.0, %v737
        %v739 = vpop.f32.mrf.mxu0
        %740 = vdwg.mxu0
        %v749 = vunpack.c.l.b16 %v665
        %v750 = vunpack.c.l.b16 %v666
        %v751 = vunpack.c.l.b16 %v667
        %v752 = vunpack.c.l.b16 %v668
        %v753 = vunpack.c.l.b16 %v669
        %v754 = vunpack.c.l.b16 %v670
        %v755 = vunpack.c.l.b16 %v671
        %v756 = vunpack.c.l.b16 %v672
        %v757 = vpack.c.b16 %v750, %v749
        %v758 = vpack.c.b16 %v752, %v751
        %v759 = vpack.c.b16 %v754, %v753
        %v760 = vpack.c.b16 %v756, %v755
        %v766 = vsel %vm509, %v664, 0
        %768 = vmatpush.bf16.msra.mxu0 0
        %769 = vmatpush.bf16.msra.mxu0 0
        %770 = vmatpush.bf16.msra.mxu0 0
        %771 = vmatpush.bf16.msra.mxu0 0
        %772 = vmatpush.bf16.msra.mxu0 %v760
        %773 = vmatpush.bf16.msra.mxu0 %v759
        %774 = vmatpush.bf16.msra.mxu0 %v758
        %775 = vmatpush.bf16.msra.mxu0 %v757
        %776 = vmatmul.bf16.gmra.mxu0 %v766
        %v777 = vpop.f32.mrf.mxu0
        %v778 = vadd.f32 %v738, %v777
        %v779 = vpop.f32.mrf.mxu0
        %780 = vdwg.mxu0
        %s781 = scalar_lea.vmem %s4, 4
        %v782 = vld [vmem:[%s781] sm:$0x3]
        %v784 = vsel %vm643, %v782, 0
        %786 = vmatpush.bf16.msra.mxu0 0
        %787 = vmatpush.bf16.msra.mxu0 0
        %788 = vmatpush.bf16.msra.mxu0 0
        %789 = vmatpush.bf16.msra.mxu0 0
        %790 = vmatpush.bf16.msra.mxu0 0
        %791 = vmatpush.bf16.msra.mxu0 0
        %792 = vmatpush.bf16.msra.mxu0 0
        %793 = vmatpush.bf16.msra.mxu0 %v649
        %794 = vmatmul.bf16.gmra.mxu0 %v784
        %v795 = vpop.f32.mrf.mxu0
        %v796 = vadd.f32 0.0, %v795
        %v797 = vpop.f32.mrf.mxu0
        %798 = vdwg.mxu0
        %v799 = vpack.c.bf16 %v796, %v796
        %s800 = scalar_lea.vmem %s5, 64
        %v801 = vld [vmem:[%s800] sm:$0xf]
        %v802 = vld [vmem:[%s800 + $0x4] sm:$0xf]
        %v803 = vld [vmem:[%s800 + $0x8] sm:$0xf]
        %v804 = vld [vmem:[%s800 + $0xc] sm:$0xf]
        %v805 = vld [vmem:[%s800 + $0x10] sm:$0xf]
        %v806 = vld [vmem:[%s800 + $0x14] sm:$0xf]
        %v807 = vld [vmem:[%s800 + $0x18] sm:$0xf]
        %v808 = vld [vmem:[%s800 + $0x1c] sm:$0xf]
        %v817 = vunpack.c.l.b16 %v801
        %v818 = vunpack.c.l.b16 %v802
        %v819 = vunpack.c.l.b16 %v803
        %v820 = vunpack.c.l.b16 %v804
        %v821 = vunpack.c.l.b16 %v805
        %v822 = vunpack.c.l.b16 %v806
        %v823 = vunpack.c.l.b16 %v807
        %v824 = vunpack.c.l.b16 %v808
        %v825 = vpack.c.b16 %v818, %v817
        %v826 = vpack.c.b16 %v820, %v819
        %v827 = vpack.c.b16 %v822, %v821
        %v828 = vpack.c.b16 %v824, %v823
        %v834 = vsel %vm509, %v799, 0
        %836 = vmatpush.bf16.msra.mxu0 0
        %837 = vmatpush.bf16.msra.mxu0 0
        %838 = vmatpush.bf16.msra.mxu0 0
        %839 = vmatpush.bf16.msra.mxu0 0
        %840 = vmatpush.bf16.msra.mxu0 %v828
        %841 = vmatpush.bf16.msra.mxu0 %v827
        %842 = vmatpush.bf16.msra.mxu0 %v826
        %843 = vmatpush.bf16.msra.mxu0 %v825
        %844 = vmatmul.bf16.gmra.mxu0 %v834
        %v845 = vpop.f32.mrf.mxu0
        %v846 = vadd.f32 0.0, %v845
        %v847 = vpop.f32.mrf.mxu0
        %848 = vdwg.mxu0
        %v849 = vadd.f32 %v778, %v846
        %v850 = vld [vmem:[%s6] sm:$0x1]
        %v852 = vperm.slane %v850, 0
        %v854 = vadd.f32 %v849, %v852
        %v855 = vmax.f32 %v854, 0.0
        %v856 = vpack.c.bf16 %v855, %v855
        %v857 = vld [vmem:[%s7] sm:$0xf]
        %v858 = vld [vmem:[%s7 + $0x4] sm:$0xf]
        %v859 = vld [vmem:[%s7 + $0x8] sm:$0xf]
        %v860 = vld [vmem:[%s7 + $0xc] sm:$0xf]
        %v861 = vld [vmem:[%s7 + $0x10] sm:$0xf]
        %v862 = vld [vmem:[%s7 + $0x14] sm:$0xf]
        %v863 = vld [vmem:[%s7 + $0x18] sm:$0xf]
        %v864 = vld [vmem:[%s7 + $0x1c] sm:$0xf]
        %s865 = scalar_lea.vmem %s7, 32
        %v866 = vld [vmem:[%s865] sm:$0xf]
        %v867 = vld [vmem:[%s865 + $0x4] sm:$0xf]
        %v868 = vld [vmem:[%s865 + $0x8] sm:$0xf]
        %v869 = vld [vmem:[%s865 + $0xc] sm:$0xf]
        %v870 = vld [vmem:[%s865 + $0x10] sm:$0xf]
        %v871 = vld [vmem:[%s865 + $0x14] sm:$0xf]
        %v872 = vld [vmem:[%s865 + $0x18] sm:$0xf]
        %v873 = vld [vmem:[%s865 + $0x1c] sm:$0xf]
        %v875 = vunpack.c.l.b16 %v856
        %v876 = vpack.c.b16 %v875, %v875
        %v878 = vshrl.u32 %v876, 16
        %v888 = vunpack.c.l.b16 %v866
        %v889 = vunpack.c.l.b16 %v867
        %v890 = vunpack.c.l.b16 %v868
        %v891 = vunpack.c.l.b16 %v869
        %v892 = vunpack.c.l.b16 %v870
        %v893 = vunpack.c.l.b16 %v871
        %v894 = vunpack.c.l.b16 %v872
        %v895 = vunpack.c.l.b16 %v873
        %v896 = vpack.c.b16 %v889, %v888
        %v897 = vpack.c.b16 %v891, %v890
        %v898 = vpack.c.b16 %v893, %v892
        %v899 = vpack.c.b16 %v895, %v894
        %v905 = vsel %vm509, %v878, 0
        %907 = vmatpush.bf16.msra.mxu0 0
        %908 = vmatpush.bf16.msra.mxu0 0
        %909 = vmatpush.bf16.msra.mxu0 0
        %910 = vmatpush.bf16.msra.mxu0 0
        %911 = vmatpush.bf16.msra.mxu0 %v899
        %912 = vmatpush.bf16.msra.mxu0 %v898
        %913 = vmatpush.bf16.msra.mxu0 %v897
        %914 = vmatpush.bf16.msra.mxu0 %v896
        %915 = vmatmul.bf16.gmra.mxu0 %v905
        %v916 = vpop.f32.mrf.mxu0
        %v917 = vadd.f32 0.0, %v916
        %v918 = vpop.f32.mrf.mxu0
        %919 = vdwg.mxu0
        %v928 = vunpack.c.l.b16 %v857
        %v929 = vunpack.c.l.b16 %v858
        %v930 = vunpack.c.l.b16 %v859
        %v931 = vunpack.c.l.b16 %v860
        %v932 = vunpack.c.l.b16 %v861
        %v933 = vunpack.c.l.b16 %v862
        %v934 = vunpack.c.l.b16 %v863
        %v935 = vunpack.c.l.b16 %v864
        %v936 = vpack.c.b16 %v929, %v928
        %v937 = vpack.c.b16 %v931, %v930
        %v938 = vpack.c.b16 %v933, %v932
        %v939 = vpack.c.b16 %v935, %v934
        %v945 = vsel %vm509, %v856, 0
        %947 = vmatpush.bf16.msra.mxu0 0
        %948 = vmatpush.bf16.msra.mxu0 0
        %949 = vmatpush.bf16.msra.mxu0 0
        %950 = vmatpush.bf16.msra.mxu0 0
        %951 = vmatpush.bf16.msra.mxu0 %v939
        %952 = vmatpush.bf16.msra.mxu0 %v938
        %953 = vmatpush.bf16.msra.mxu0 %v937
        %954 = vmatpush.bf16.msra.mxu0 %v936
        %955 = vmatmul.bf16.gmra.mxu0 %v945
        %v956 = vpop.f32.mrf.mxu0
        %v957 = vadd.f32 %v917, %v956
        %v958 = vpop.f32.mrf.mxu0
        %959 = vdwg.mxu0
        %s960 = scalar_lea.vmem %s7, 64
        %v961 = vld [vmem:[%s960] sm:$0xf]
        %v962 = vld [vmem:[%s960 + $0x4] sm:$0xf]
        %v963 = vld [vmem:[%s960 + $0x8] sm:$0xf]
        %v964 = vld [vmem:[%s960 + $0xc] sm:$0xf]
        %v965 = vld [vmem:[%s960 + $0x10] sm:$0xf]
        %v966 = vld [vmem:[%s960 + $0x14] sm:$0xf]
        %v967 = vld [vmem:[%s960 + $0x18] sm:$0xf]
        %v968 = vld [vmem:[%s960 + $0x1c] sm:$0xf]
        %v969 = vrot.slane %v876, 1
        %v978 = vunpack.c.l.b16 %v961
        %v979 = vunpack.c.l.b16 %v962
        %v980 = vunpack.c.l.b16 %v963
        %v981 = vunpack.c.l.b16 %v964
        %v982 = vunpack.c.l.b16 %v965
        %v983 = vunpack.c.l.b16 %v966
        %v984 = vunpack.c.l.b16 %v967
        %v985 = vunpack.c.l.b16 %v968
        %v986 = vpack.c.b16 %v979, %v978
        %v987 = vpack.c.b16 %v981, %v980
        %v988 = vpack.c.b16 %v983, %v982
        %v989 = vpack.c.b16 %v985, %v984
        %v995 = vsel %vm509, %v969, 0
        %997 = vmatpush.bf16.msra.mxu0 0
        %998 = vmatpush.bf16.msra.mxu0 0
        %999 = vmatpush.bf16.msra.mxu0 0
        %1000 = vmatpush.bf16.msra.mxu0 0
        %1001 = vmatpush.bf16.msra.mxu0 %v989
        %1002 = vmatpush.bf16.msra.mxu0 %v988
        %1003 = vmatpush.bf16.msra.mxu0 %v987
        %1004 = vmatpush.bf16.msra.mxu0 %v986
        %1005 = vmatmul.bf16.gmra.mxu0 %v995
        %v1006 = vpop.f32.mrf.mxu0
        %v1007 = vadd.f32 0.0, %v1006
        %v1008 = vpop.f32.mrf.mxu0
        %1009 = vdwg.mxu0
        %v1010 = vadd.f32 %v957, %v1007
        %s1011 = scalar_lea.vmem %s7, 96
        %v1012 = vld [vmem:[%s1011] sm:$0xf]
        %v1013 = vld [vmem:[%s1011 + $0x4] sm:$0xf]
        %v1014 = vld [vmem:[%s1011 + $0x8] sm:$0xf]
        %v1015 = vld [vmem:[%s1011 + $0xc] sm:$0xf]
        %v1016 = vld [vmem:[%s1011 + $0x10] sm:$0xf]
        %v1017 = vld [vmem:[%s1011 + $0x14] sm:$0xf]
        %v1018 = vld [vmem:[%s1011 + $0x18] sm:$0xf]
        %v1019 = vld [vmem:[%s1011 + $0x1c] sm:$0xf]
        %v1020 = vrot.slane %v878, 1
        %v1029 = vunpack.c.l.b16 %v1012
        %v1030 = vunpack.c.l.b16 %v1013
        %v1031 = vunpack.c.l.b16 %v1014
        %v1032 = vunpack.c.l.b16 %v1015
        %v1033 = vunpack.c.l.b16 %v1016
        %v1034 = vunpack.c.l.b16 %v1017
        %v1035 = vunpack.c.l.b16 %v1018
        %v1036 = vunpack.c.l.b16 %v1019
        %v1037 = vpack.c.b16 %v1030, %v1029
        %v1038 = vpack.c.b16 %v1032, %v1031
        %v1039 = vpack.c.b16 %v1034, %v1033
        %v1040 = vpack.c.b16 %v1036, %v1035
        %v1046 = vsel %vm509, %v1020, 0
        %1048 = vmatpush.bf16.msra.mxu0 0
        %1049 = vmatpush.bf16.msra.mxu0 0
        %1050 = vmatpush.bf16.msra.mxu0 0
        %1051 = vmatpush.bf16.msra.mxu0 0
        %1052 = vmatpush.bf16.msra.mxu0 %v1040
        %1053 = vmatpush.bf16.msra.mxu0 %v1039
        %1054 = vmatpush.bf16.msra.mxu0 %v1038
        %1055 = vmatpush.bf16.msra.mxu0 %v1037
        %1056 = vmatmul.bf16.gmra.mxu0 %v1046
        %v1057 = vpop.f32.mrf.mxu0
        %v1058 = vadd.f32 0.0, %v1057
        %v1059 = vpop.f32.mrf.mxu0
        %1060 = vdwg.mxu0
        %v1061 = vadd.f32 %v1010, %v1058
        %v1062 = vld [vmem:[%s8] sm:$0x1]
        %v1063 = vadd.f32 %v1061, %v1062
        %v1064 = vmax.f32 %v1063, 0.0
        %v1065 = vpack.c.bf16 %v1064, %v1064
        %v1066 = vld [vmem:[%s9] sm:$0xf]
        %v1067 = vld [vmem:[%s9 + $0x4] sm:$0xf]
        %v1068 = vld [vmem:[%s9 + $0x8] sm:$0xf]
        %v1069 = vld [vmem:[%s9 + $0xc] sm:$0xf]
        %v1070 = vld [vmem:[%s10] sm:$0x1]
        %v1075 = vunpack.c.l.b16 %v1066
        %v1076 = vunpack.c.l.b16 %v1067
        %v1077 = vunpack.c.l.b16 %v1068
        %v1078 = vunpack.c.l.b16 %v1069
        %v1079 = vpack.c.b16 %v1076, %v1075
        %v1080 = vpack.c.b16 %v1078, %v1077
        %vm1083 = vcmask 261120
        %v1085 = vsel %vm1083, %v1065, 0
        %1087 = vmatpush.bf16.msra.mxu0 0
        %1088 = vmatpush.bf16.msra.mxu0 0
        %1089 = vmatpush.bf16.msra.mxu0 0
        %1090 = vmatpush.bf16.msra.mxu0 0
        %1091 = vmatpush.bf16.msra.mxu0 0
        %1092 = vmatpush.bf16.msra.mxu0 0
        %1093 = vmatpush.bf16.msra.mxu0 %v1080
        %1094 = vmatpush.bf16.msra.mxu0 %v1079
        %1095 = vmatmul.bf16.gmra.mxu0 %v1085
        %v1096 = vpop.f32.mrf.mxu0
        %v1097 = vadd.f32 %v1070, %v1096
        %v1098 = vpop.f32.mrf.mxu0
        %1099 = vdwg.mxu0
        %vm1100 = vcmask 57344
        %1101 = vst.msk [vmem:[%s409] sm:$0x1] %vm1100, %v1097
        %1103 = vrot.lane.b32.xlu0 %v1097, 120
        %v1104 = vpop.permute.xlu0 %1103
        %1106 = vst.msk [vmem:[%s415] sm:$0x1] %vm1100, %v1104
        %s1107 = sand.u32 %s274, 1
        %s1108 = scalar_lea.sflag [#allocation3], %s1107
        %s1109 = sand.u32 %s274, 1
        %s1110 = scalar_lea.vmem [#allocation2], %s1109
        %s1111 = sand.u32 %s300, 1
        %s1112 = scalar_lea.sflag [#allocation5], %s1111
        %s1113 = sand.u32 %s300, 1
        %s1114 = scalar_lea.vmem [#allocation4], %s1113
        // Predicated region
        $region65: #{encoder_forward.1} parent=63 // pred_check
          %p1115 = pneg %p284
        $region66: #{encoder_forward.1} parent=63 // pred_check_branch
          %1117 = sbr.rel (%p1115) target = $region68
        $region67: #{encoder_forward.1} parent=63 // pred_region
          %1119 = vsyncadd %s1108, 0
          %s1120 = scalar_lea.hbm %s11, %s30
          %s1122 = sshll.u32 %s1110, 4
          %s1123 = int_to_ptr.vmem [resolvable:$true] %s1122
          %s1124 = sshll.u32 %s1120, 4
          %s1125 = int_to_ptr.hbm [resolvable:$true] %s1124
          %1127 = dma.vmem_to_hbm [thread:$0]  %s1123, 16, %s1125, %s1108
        $region68: #{encoder_forward.1} parent=63 // pred_fallthru
          _
        // Predicated region
        $region69: #{encoder_forward.1} parent=63 // pred_check
          %p1128 = pneg %p310
        $region70: #{encoder_forward.1} parent=63 // pred_check_branch
          %1130 = sbr.rel (%p1128) target = $region72
        $region71: #{encoder_forward.1} parent=63 // pred_region
          %1132 = vsyncadd %s1112, 0
          %s1133 = scalar_lea.hbm %s12, %s30
          %s1135 = sshll.u32 %s1114, 4
          %s1136 = int_to_ptr.vmem [resolvable:$true] %s1135
          %s1137 = sshll.u32 %s1133, 4
          %s1138 = int_to_ptr.hbm [resolvable:$true] %s1137
          %1140 = dma.vmem_to_hbm [thread:$0]  %s1136, 16, %s1138, %s1112
        $region72: #{encoder_forward.1} parent=63 // pred_fallthru
          _
      $region64: #{encoder_forward.1} parent=5 // pred_fallthru
        _
      %p1141 = scmp.le.s32.totalorder 2, %s25
      // Predicated region
      $region73: #{encoder_forward.1} parent=5 // pred_check
        %p1142 = pneg %p1141
      $region74: #{encoder_forward.1} parent=5 // pred_check_branch
        %1144 = sbr.rel (%p1142) target = $region76
      $region75: #{encoder_forward.1} parent=5 // pred_region
        %s1145 = ssub.s32 %s25, 2
        // Predicated region
        $region77: #{encoder_forward.1} parent=75 // pred_check
          %p1146 = pneg %p290
        $region78: #{encoder_forward.1} parent=75 // pred_check_branch
          %1148 = sbr.rel (%p1146) target = $region80
        $region79: #{encoder_forward.1} parent=75 // pred_region
          %s1149 = sand.u32 %s275, 1
          %s1150 = scalar_lea.sflag [#allocation3], %s1149
          %s1151 = sand.u32 %s275, 1
          %s1152 = scalar_lea.vmem [#allocation2], %s1151
          %1154 = dma.done %s1150, 16
        $region80: #{encoder_forward.1} parent=75 // pred_fallthru
          _
        // Predicated region
        $region81: #{encoder_forward.1} parent=75 // pred_check
          %p1155 = pneg %p316
        $region82: #{encoder_forward.1} parent=75 // pred_check_branch
          %1157 = sbr.rel (%p1155) target = $region84
        $region83: #{encoder_forward.1} parent=75 // pred_region
          %s1158 = sand.u32 %s301, 1
          %s1159 = scalar_lea.sflag [#allocation5], %s1158
          %s1160 = sand.u32 %s301, 1
          %s1161 = scalar_lea.vmem [#allocation4], %s1160
          %1163 = dma.done %s1159, 16
        $region84: #{encoder_forward.1} parent=75 // pred_fallthru
          _
      $region76: #{encoder_forward.1} parent=5 // pred_fallthru
        _
    $region6: #{encoder_forward.1} parent=1 // loop_footer
      %s29 = sadd.s32 1, %s25
    $region7: #{encoder_forward.1} parent=1 // loop_footer_branch
      %24 = sbr.rel target = $region3
    $region8: #{encoder_forward.1} parent=1 // loop_exit
      _
    %1164 = vsyncpa [#allocation3], 1
    %s1165 = scalar_lea.sflag [#allocation3], 1
    %1166 = vsyncpa %s1165, 1
    %1167 = vsyncpa [#allocation5], 1
    %s1168 = scalar_lea.sflag [#allocation5], 1
    %1169 = vsyncpa %s1168, 1

</llo_original>
